<compile_context>
chip_gen: v5e
topology: v5e:2x2
jax: 0.10.0
libtpu: 0.0.40
codegen_flags: <defaults>
</compile_context>

<pallas_src>
import functools

import jax
import jax.numpy as jnp
import numpy as np
from jax.experimental import pallas as pl
from jax.experimental.pallas import tpu as pltpu

LANE = 128
SUBLANE = 8
NCORES = 2  # leading "parallel" grid axis: uses both TensorCores on megacore parts (v7x)


def _round_up(x, m):
    return (x + m - 1) // m * m


def _vmem_capacity_bytes(default=64 << 20):
    """Physical VMEM of the current TPU generation (fallback: v7x-safe 64 MiB)."""
    try:
        info = pltpu.get_tpu_info()
        for name in ("vmem_capacity_bytes", "vmem_size_bytes", "vmem_bytes"):
            cap = getattr(info, name, None)
            if cap:
                return int(cap)
    except Exception:
        pass
    return default


def _pick_tiling(num_spot, matmul_dtype, l_tile_budget_bytes):
    """Choose L column-tile width tk and padded size n_pad.

    n_pad is a multiple of NCORES*tk so the reduction range splits evenly across the
    parallel halves; one (n_pad, tk) L tile stays within the per-buffer VMEM budget.
    """
    n_base = _round_up(num_spot, LANE)
    item = np.dtype(matmul_dtype).itemsize
    tk = LANE
    for cand in (4096, 2048, 1024, 512, 256, 128):
        if cand <= n_base and _round_up(num_spot, NCORES * cand) * cand * item <= l_tile_budget_bytes:
            tk = cand
            break
    # TODO(synk): for N_pad >= 8192 a 2-D (rows x cols) L tile would keep DMA rows long
    # instead of shrinking tk; not needed at the sizes exercised here.
    n_pad = _round_up(num_spot, NCORES * tk)
    return tk, n_pad


def _quad_kernel(beta_ref, gmat_ref, lcol_ref, out_ref, lhs_ref, acc_ref, *,
                 tk, mm_precision):
    """One grid step: per-lane partial quadratic forms for one streamed L column tile.

    Grid = (NCORES parallel halves, column tiles per half).  The finalize branch of each
    half does the cross-lane reduction, folds the per-batch (G-row) sum via a 0/1
    grouping matmul and writes that half's lane-dense (bp, 128) output slab once.
    """
    c = pl.program_id(0)
    k = pl.program_id(1)
    nk1 = pl.num_programs(1)

    @pl.when(k == 0)
    def _init():
        acc_ref[...] = jnp.zeros_like(acc_ref)
        # cast the matmul LHS once per half (no per-call XLA cast, no per-step recast)
        lhs_ref[...] = beta_ref[...].astype(lhs_ref.dtype)

    # (BGp, Np) @ (Np, tk) on the MXU, f32 accumulation.
    bl = jnp.dot(lhs_ref[...], lcol_ref[...],
                 preferred_element_type=jnp.float32, precision=mm_precision)

    # elementwise factor stays f32: slice the resident f32 betas (lane-aligned start)
    col0 = pl.multiple_of((c * nk1 + k) * tk, LANE)
    prod = bl * beta_ref[:, pl.ds(col0, tk)]

    # fold tk lanes into the 128-wide accumulator with full-width VPU adds only
    partial = prod[:, 0:LANE]
    for i in range(1, tk // LANE):
        partial = partial + prod[:, i * LANE:(i + 1) * LANE]
    acc_ref[...] += partial

    @pl.when(k == nk1 - 1)
    def _finalize():
        row_q = jnp.sum(acc_ref[...], axis=1, keepdims=True)              # (BGp, 1)
        row_q = jnp.broadcast_to(row_q, (acc_ref.shape[0], LANE))         # (BGp, 128)
        out_ref[...] = jnp.dot(gmat_ref[...], row_q,                      # (bp, 128)
                               preferred_element_type=jnp.float32,
                               precision=jax.lax.Precision.HIGHEST)


def quad_forms(betas_f32, gmat, l_mm, num_batches, *, tk, matmul_dtype, vmem_limit_bytes):
    """betas_f32: (BGp, Np) zero-padded f32 stack of permuted betas (row b*G+g = beta_b[g]).
    gmat: (Bp, BGp) 0/1 grouping matrix mapping rows -> batches.
    l_mm: (Np, Np) zero-padded Laplacian, already stored in matmul_dtype.
    Returns (num_batches,) f32 quadratic forms trace(beta_b @ L @ beta_b^T)."""
    bgp, n_pad = betas_f32.shape
    bp = gmat.shape[0]
    assert n_pad % (NCORES * tk) == 0
    nk_half = n_pad // (NCORES * tk)

    mm_precision = (jax.lax.Precision.HIGHEST
                    if np.dtype(matmul_dtype) == np.dtype(np.float32)
                    else jax.lax.Precision.DEFAULT)
    kernel = functools.partial(_quad_kernel, tk=tk, mm_precision=mm_precision)

    def run(single_buffer_residents):
        res_kw = {"pipeline_mode": pl.Buffered(1)} if single_buffer_residents else {}
        return pl.pallas_call(
            kernel,
            out_shape=jax.ShapeDtypeStruct((NCORES * bp, LANE), jnp.float32),
            grid=(NCORES, nk_half),
            in_specs=[
                # resident f32 betas: matmul-LHS source + f32 elementwise factor
                pl.BlockSpec((bgp, n_pad), lambda c, k: (0, 0), **res_kw),
                # resident 0/1 grouping matrix (rows -> batches)
                pl.BlockSpec((bp, bgp), lambda c, k: (0, 0), **res_kw),
                # streamed L column tile; half c owns columns [c*nk_half*tk, ...)
                pl.BlockSpec((n_pad, tk), lambda c, k: (0, c * nk_half + k)),
            ],
            # each parallel half writes its own lane-dense slab once, at its last step
            out_specs=pl.BlockSpec((bp, LANE), lambda c, k: (c, 0)),
            scratch_shapes=[pltpu.VMEM((bgp, n_pad), matmul_dtype),   # cast matmul LHS
                            pltpu.VMEM((bgp, LANE), jnp.float32)],    # per-lane accum
            compiler_params=pltpu.CompilerParams(
                dimension_semantics=("parallel", "arbitrary"),
                vmem_limit_bytes=int(vmem_limit_bytes)),
        )(betas_f32, gmat, l_mm)

    try:
        out = run(True)   # single-buffer the constant-index resident inputs (saves VMEM)
    except Exception:     # older jax without BlockSpec pipeline_mode support
        out = run(False)

    total = out.reshape(NCORES, bp, LANE).sum(axis=0)   # sum the per-core partial slabs
    return total[:num_batches, 0]


def make_inv_cov(num_spot):
    # TODO(synk): the SpatialWeightMatrix class was not provided; synthesize a
    # deterministic ring-graph adjacency and build the icar / rho=1 /
    # standardize_cov=True precision matrix, i.e. the symmetric-normalized graph
    # Laplacian I - D^{-1/2} W D^{-1/2}.
    idx = jnp.arange(num_spot)
    w = jnp.zeros((num_spot, num_spot), jnp.float32)
    w = w.at[idx, (idx + 1) % num_spot].set(1.0)
    w = w.at[idx, (idx - 1) % num_spot].set(1.0)
    d_isqrt = 1.0 / jnp.sqrt(w.sum(axis=1))
    lap = jnp.eye(num_spot, dtype=jnp.float32) - d_isqrt[:, None] * w * d_isqrt[None, :]
    return lap.astype(jnp.float32)


class ContrastiveSpatialLossPallas:
    """JAX/Pallas port of ContrastiveSpatialLoss.forward (prior='icar', rho=1,
    use_sparse=True, standardize_cov=True, single spatial weight matrix ->
    confidences = ones(1))."""

    def __init__(self, num_spot, num_perm=10, neg2pos_ratio=0.5, lower_bound=-1.0,
                 matmul_dtype=jnp.bfloat16):
        self.num_spot = num_spot
        self.inv_cov = make_inv_cov(num_spot)              # (N, N) graph Laplacian, f32
        self.confidences = jnp.ones((1,), jnp.float32)     # torch.ones(1)
        self.num_perm = num_perm
        self.neg2pos_ratio = neg2pos_ratio
        self.lower_bound = lower_bound
        # bfloat16 default: kernel is HBM-bound on the L stream; accumulation and the
        # elementwise beta factor stay f32 regardless.
        self.matmul_dtype = matmul_dtype

        # per-generation VMEM budget (v5e/v6e: 128 MiB physical, v7x: 64 MiB)
        cap = _vmem_capacity_bytes()
        self.vmem_limit_bytes = int(min(cap * 3 // 4, 100 << 20))
        self.tk, self.n_pad = _pick_tiling(num_spot, matmul_dtype,
                                           self.vmem_limit_bytes // 4)

        # cache the padded Laplacian already in matmul_dtype (no per-call cast pass)
        padded = (jnp.zeros((self.n_pad, self.n_pad), jnp.float32)
                  .at[:num_spot, :num_spot].set(self.inv_cov))
        self.inv_cov_padded_mm = padded.astype(matmul_dtype)
        # TODO(synk): use_sparse=True in the original builds a sparse precision matrix;
        # a stencil / CSR-gather kernel would replace this dense O(N^2) L stream for
        # large real spatial graphs.

    def _make_perms(self, key, num_spot):
        # batch 0 = identity (positive); batches 1..num_perm = random permutations
        # (torch.randperm replaced by jax.random.permutation under an explicit key).
        perms = [jnp.arange(num_spot)]
        for _ in range(self.num_perm):
            key, sub = jax.random.split(key)
            perms.append(jax.random.permutation(sub, num_spot))
        return jnp.stack(perms)                            # (B, N)

    def __call__(self, coefs, key, normalize=True):
        g, n = coefs.shape
        assert n == self.num_spot
        b = 1 + self.num_perm
        perms = self._make_perms(key, n)                   # (B, N)
        betas = jax.vmap(lambda p: coefs[:, p])(perms)     # (B, G, N)

        bg = b * g
        bgp = _round_up(bg, 16)       # 16 rows: sublane-packing friendly for bf16 too
        bp = _round_up(b, SUBLANE)
        n_pad = self.n_pad

        # one stacked, padded f32 LHS for the whole batch (row b*G + g = beta_b[g])
        betas_stacked = (jnp.zeros((bgp, n_pad), jnp.float32)
                         .at[:bg, :n].set(betas.reshape(bg, n).astype(jnp.float32)))
        row_ids = jnp.arange(bg)
        gmat = jnp.zeros((bp, bgp), jnp.float32).at[row_ids // g, row_ids].set(1.0)

        quads = quad_forms(betas_stacked, gmat, self.inv_cov_padded_mm, b,
                           tk=self.tk, matmul_dtype=self.matmul_dtype,
                           vmem_limit_bytes=self.vmem_limit_bytes)        # (B,)
        quads = quads * self.confidences[0]                # group_scales = ones(1)
        if normalize:
            quads = quads / (g * n)

        pos_loss = quads[0]
        neg_loss = jnp.mean(quads[1:])
        total_loss = pos_loss - self.neg2pos_ratio * neg_loss
        lower = self.lower_bound if normalize else self.lower_bound * g * n
        return jnp.maximum(total_loss, lower)


if __name__ == "__main__":
    key = jax.random.PRNGKey(0)
    G, N = 4, 16
    k_coefs, k_perm = jax.random.split(key)
    coefs = jax.random.normal(k_coefs, (G, N), dtype=jnp.float32)

    def reference(loss_mod, lhs_dtype):
        # pure-JAX reference of the same forward math (same permutations); lhs_dtype
        # mirrors the kernel's matmul LHS / L rounding so the check can be tight.
        perms = loss_mod._make_perms(k_perm, N)
        betas = jax.vmap(lambda p: coefs[:, p])(perms)
        lhs = betas.astype(lhs_dtype).astype(jnp.float32)
        lap = loss_mod.inv_cov.astype(lhs_dtype).astype(jnp.float32)
        q = jnp.einsum("bgn,nm,bgm->b", lhs, lap, betas,
                       precision=jax.lax.Precision.HIGHEST) / (G * N)
        return jnp.maximum(q[0] - loss_mod.neg2pos_ratio * jnp.mean(q[1:]),
                           loss_mod.lower_bound)

    # default path: bfloat16 L stream / matmul LHS, f32 elementwise + accumulation
    loss_bf16 = ContrastiveSpatialLossPallas(num_spot=N, num_perm=10,
                                             neg2pos_ratio=0.5, lower_bound=-1.0)
    out_bf16 = jax.block_until_ready(loss_bf16(coefs, k_perm, normalize=True))
    ref_match = reference(loss_bf16, jnp.bfloat16)     # dtype-matched reference
    ref_f32 = reference(loss_bf16, jnp.float32)        # full-precision sanity reference
    assert bool(jnp.allclose(out_bf16, ref_match, atol=1e-4, rtol=1e-4)), (out_bf16, ref_match)
    assert bool(jnp.allclose(out_bf16, ref_f32, atol=3e-2, rtol=3e-2)), (out_bf16, ref_f32)

    # full-f32 fallback path, tight check against the f32 reference
    loss_f32 = ContrastiveSpatialLossPallas(num_spot=N, num_perm=10,
                                            neg2pos_ratio=0.5, lower_bound=-1.0,
                                            matmul_dtype=jnp.float32)
    out_f32 = jax.block_until_ready(loss_f32(coefs, k_perm, normalize=True))
    assert bool(jnp.allclose(out_f32, ref_f32, atol=1e-4, rtol=1e-4)), (out_f32, ref_f32)

    print("KERNEL_OK")
</pallas_src>

<mosaic_0001>
module attributes {stable_mosaic.version = 11 : i64} {
  func.func @_quad_kernel(%arg0: i32, %arg1: i32, %arg2: memref<48x256xf32, #tpu.memory_space<vmem>>, %arg3: memref<16x48xf32, #tpu.memory_space<vmem>>, %arg4: memref<256x128xbf16, #tpu.memory_space<vmem>>, %arg5: memref<16x128xf32, #tpu.memory_space<vmem>>, %arg6: memref<48x256xbf16, #tpu.memory_space<vmem>>, %arg7: memref<48x128xf32, #tpu.memory_space<vmem>>) attributes {dimension_semantics = [#tpu.dimension_semantics<parallel>, #tpu.dimension_semantics<arbitrary>], iteration_bounds = array<i64: 2, 1>, scalar_prefetch = 0 : i64, scratch_operands = 2 : i64, tpu.core_type = #tpu.core_type<tc>, window_params = [{pipeline_mode = #tpu.pipeline_mode<synchronous>, transform_indices = @transform_0, window_bounds = array<i64: 48, 256>}, {pipeline_mode = #tpu.pipeline_mode<synchronous>, transform_indices = @transform_1, window_bounds = array<i64: 16, 48>}, {transform_indices = @transform_2, window_bounds = array<i64: 256, 128>}, {transform_indices = @transform_3, window_bounds = array<i64: 16, 128>}]} {
    %c0_i32 = arith.constant 0 : i32
    %0 = arith.cmpi eq, %arg1, %c0_i32 : i32
    %1 = arith.extui %0 : i1 to i32
    %c0_i32_0 = arith.constant 0 : i32
    %2 = arith.cmpi ne, %1, %c0_i32_0 : i32
    scf.if %2 {
      %cst_11 = arith.constant 0.000000e+00 : f32
      %19 = vector.broadcast %cst_11 : f32 to vector<48x128xf32>
      %c0_12 = arith.constant 0 : index
      %c0_13 = arith.constant 0 : index
      %20 = vector.load %arg7[%c0_12, %c0_13] : memref<48x128xf32, #tpu.memory_space<vmem>>, vector<48x128xf32>
      tpu.vector_store %arg7[%c0_12, %c0_13], %19 {strides = array<i32>} : memref<48x128xf32, #tpu.memory_space<vmem>>, vector<48x128xf32>,
      %c0_14 = arith.constant 0 : index
      %c0_15 = arith.constant 0 : index
      %21 = vector.load %arg2[%c0_14, %c0_15] : memref<48x256xf32, #tpu.memory_space<vmem>>, vector<48x256xf32>
      %22 = arith.truncf %21 : vector<48x256xf32> to vector<48x256xbf16>
      %c0_16 = arith.constant 0 : index
      %c0_17 = arith.constant 0 : index
      %23 = vector.load %arg6[%c0_16, %c0_17] : memref<48x256xbf16, #tpu.memory_space<vmem>>, vector<48x256xbf16>
      tpu.vector_store %arg6[%c0_16, %c0_17], %22 {strides = array<i32>} : memref<48x256xbf16, #tpu.memory_space<vmem>>, vector<48x256xbf16>,
    } else {
    }
    %c0 = arith.constant 0 : index
    %c0_1 = arith.constant 0 : index
    %3 = vector.load %arg6[%c0, %c0_1] : memref<48x256xbf16, #tpu.memory_space<vmem>>, vector<48x256xbf16>
    %c0_2 = arith.constant 0 : index
    %c0_3 = arith.constant 0 : index
    %4 = vector.load %arg4[%c0_2, %c0_3] : memref<256x128xbf16, #tpu.memory_space<vmem>>, vector<256x128xbf16>
    %cst = arith.constant dense<0.000000e+00> : vector<48x128xf32>
    %5 = tpu.matmul %3, %4, %cst {dimension_numbers = #tpu.dot_dimension_numbers<[1], [0], [0], [1], [0, 0, 1, 1], [], []>} : vector<48x256xbf16>, vector<256x128xbf16>, vector<48x128xf32> -> vector<48x128xf32>
    %c1_i32 = arith.constant 1 : i32
    %6 = arith.muli %arg0, %c1_i32 : i32
    %7 = arith.addi %6, %arg1 : i32
    %c128_i32 = arith.constant 128 : i32
    %8 = arith.muli %7, %c128_i32 : i32
    %9 = tpu.assume_multiple %8, 128 : i32
    %c0_4 = arith.constant 0 : index
    %10 = arith.index_cast %9 : i32 to index
    %11 = vector.load %arg2[%c0_4, %10] : memref<48x256xf32, #tpu.memory_space<vmem>>, vector<48x128xf32>
    %12 = arith.mulf %5, %11 : vector<48x128xf32>
    %c0_5 = arith.constant 0 : index
    %c0_6 = arith.constant 0 : index
    %13 = vector.load %arg7[%c0_5, %c0_6] : memref<48x128xf32, #tpu.memory_space<vmem>>, vector<48x128xf32>
    %14 = arith.addf %13, %12 : vector<48x128xf32>
    %c0_7 = arith.constant 0 : index
    %c0_8 = arith.constant 0 : index
    %15 = vector.load %arg7[%c0_7, %c0_8] : memref<48x128xf32, #tpu.memory_space<vmem>>, vector<48x128xf32>
    tpu.vector_store %arg7[%c0_7, %c0_8], %14 {strides = array<i32>} : memref<48x128xf32, #tpu.memory_space<vmem>>, vector<48x128xf32>,
    %c0_i32_9 = arith.constant 0 : i32
    %16 = arith.cmpi eq, %arg1, %c0_i32_9 : i32
    %17 = arith.extui %16 : i1 to i32
    %c0_i32_10 = arith.constant 0 : i32
    %18 = arith.cmpi ne, %17, %c0_i32_10 : i32
    scf.if %18 {
      %c0_11 = arith.constant 0 : index
      %c0_12 = arith.constant 0 : index
      %19 = vector.load %arg7[%c0_11, %c0_12] : memref<48x128xf32, #tpu.memory_space<vmem>>, vector<48x128xf32>
      %cst_13 = arith.constant dense<0.000000e+00> : vector<48xf32>
      %20 = vector.multi_reduction <add>, %19, %cst_13 [1] : vector<48x128xf32> to vector<48xf32>
      %21 = vector.shape_cast %20 : vector<48xf32> to vector<48x1xf32>
      %22 = vector.shape_cast %21 : vector<48x1xf32> to vector<48x1xf32>
      %23 = vector.broadcast %22 : vector<48x1xf32> to vector<48x128xf32>
      %c0_14 = arith.constant 0 : index
      %c0_15 = arith.constant 0 : index
      %24 = vector.load %arg3[%c0_14, %c0_15] : memref<16x48xf32, #tpu.memory_space<vmem>>, vector<16x48xf32>
      %cst_16 = arith.constant dense<0.000000e+00> : vector<16x128xf32>
      %25 = tpu.matmul %24, %23, %cst_16 {dimension_numbers = #tpu.dot_dimension_numbers<[1], [0], [0], [1], [0, 0, 1, 1], [], []>, precision = #tpu.contract_precision<fp32>} : vector<16x48xf32>, vector<48x128xf32>, vector<16x128xf32> -> vector<16x128xf32>
      %c0_17 = arith.constant 0 : index
      %c0_18 = arith.constant 0 : index
      %26 = vector.load %arg5[%c0_17, %c0_18] : memref<16x128xf32, #tpu.memory_space<vmem>>, vector<16x128xf32>
      tpu.vector_store %arg5[%c0_17, %c0_18], %25 {strides = array<i32>} : memref<16x128xf32, #tpu.memory_space<vmem>>, vector<16x128xf32>,
    } else {
    }
    return
  }
  func.func @transform_0(%arg0: i32, %arg1: i32) -> (i32, i32) {
    %c0_i32 = arith.constant 0 : i32
    %c0_i32_0 = arith.constant 0 : i32
    %c0_i32_1 = arith.constant 0 : i32
    return %c0_i32, %c0_i32_0 : i32, i32
  }
  func.func @transform_1(%arg0: i32, %arg1: i32) -> (i32, i32) {
    %c0_i32 = arith.constant 0 : i32
    %c0_i32_0 = arith.constant 0 : i32
    %c0_i32_1 = arith.constant 0 : i32
    return %c0_i32, %c0_i32_0 : i32, i32
  }
  func.func @transform_2(%arg0: i32, %arg1: i32) -> (i32, i32) {
    %c1_i32 = arith.constant 1 : i32
    %0 = arith.muli %arg0, %c1_i32 : i32
    %1 = arith.addi %0, %arg1 : i32
    %c0_i32 = arith.constant 0 : i32
    %c0_i32_0 = arith.constant 0 : i32
    return %c0_i32, %1 : i32, i32
  }
  func.func @transform_3(%arg0: i32, %arg1: i32) -> (i32, i32) {
    %c0_i32 = arith.constant 0 : i32
    %c0_i32_0 = arith.constant 0 : i32
    return %arg0, %c0_i32 : i32, i32
  }
}

module attributes {stable_mosaic.version = 11 : i64} {
  func.func @_quad_kernel(%arg0: i32, %arg1: i32, %arg2: memref<48x256xf32, #tpu.memory_space<vmem>>, %arg3: memref<16x48xf32, #tpu.memory_space<vmem>>, %arg4: memref<256x128xbf16, #tpu.memory_space<vmem>>, %arg5: memref<16x128xf32, #tpu.memory_space<vmem>>, %arg6: memref<48x256xbf16, #tpu.memory_space<vmem>>, %arg7: memref<48x128xf32, #tpu.memory_space<vmem>>) attributes {dimension_semantics = [#tpu.dimension_semantics<parallel>, #tpu.dimension_semantics<arbitrary>], iteration_bounds = array<i64: 2, 1>, scalar_prefetch = 0 : i64, scratch_operands = 2 : i64, tpu.core_type = #tpu.core_type<tc>, window_params = [{pipeline_mode = #tpu.pipeline_mode<synchronous>, transform_indices = @transform_0, window_bounds = array<i64: 48, 256>}, {pipeline_mode = #tpu.pipeline_mode<synchronous>, transform_indices = @transform_1, window_bounds = array<i64: 16, 48>}, {transform_indices = @transform_2, window_bounds = array<i64: 256, 128>}, {transform_indices = @transform_3, window_bounds = array<i64: 16, 128>}]} {
    %c0_i32 = arith.constant 0 : i32
    %0 = arith.cmpi eq, %arg1, %c0_i32 : i32
    %1 = arith.extui %0 : i1 to i32
    %c0_i32_0 = arith.constant 0 : i32
    %2 = arith.cmpi ne, %1, %c0_i32_0 : i32
    scf.if %2 {
      %cst_11 = arith.constant 0.000000e+00 : f32
      %19 = vector.broadcast %cst_11 : f32 to vector<48x128xf32>
      %c0_12 = arith.constant 0 : index
      %c0_13 = arith.constant 0 : index
      %20 = vector.load %arg7[%c0_12, %c0_13] : memref<48x128xf32, #tpu.memory_space<vmem>>, vector<48x128xf32>
      tpu.vector_store %arg7[%c0_12, %c0_13], %19 {strides = array<i32>} : memref<48x128xf32, #tpu.memory_space<vmem>>, vector<48x128xf32>,
      %c0_14 = arith.constant 0 : index
      %c0_15 = arith.constant 0 : index
      %21 = vector.load %arg2[%c0_14, %c0_15] : memref<48x256xf32, #tpu.memory_space<vmem>>, vector<48x256xf32>
      %22 = arith.truncf %21 : vector<48x256xf32> to vector<48x256xbf16>
      %c0_16 = arith.constant 0 : index
      %c0_17 = arith.constant 0 : index
      %23 = vector.load %arg6[%c0_16, %c0_17] : memref<48x256xbf16, #tpu.memory_space<vmem>>, vector<48x256xbf16>
      tpu.vector_store %arg6[%c0_16, %c0_17], %22 {strides = array<i32>} : memref<48x256xbf16, #tpu.memory_space<vmem>>, vector<48x256xbf16>,
    } else {
    }
    %c0 = arith.constant 0 : index
    %c0_1 = arith.constant 0 : index
    %3 = vector.load %arg6[%c0, %c0_1] : memref<48x256xbf16, #tpu.memory_space<vmem>>, vector<48x256xbf16>
    %c0_2 = arith.constant 0 : index
    %c0_3 = arith.constant 0 : index
    %4 = vector.load %arg4[%c0_2, %c0_3] : memref<256x128xbf16, #tpu.memory_space<vmem>>, vector<256x128xbf16>
    %cst = arith.constant dense<0.000000e+00> : vector<48x128xf32>
    %5 = tpu.matmul %3, %4, %cst {dimension_numbers = #tpu.dot_dimension_numbers<[1], [0], [0], [1], [0, 0, 1, 1], [], []>} : vector<48x256xbf16>, vector<256x128xbf16>, vector<48x128xf32> -> vector<48x128xf32>
    %c1_i32 = arith.constant 1 : i32
    %6 = arith.muli %arg0, %c1_i32 : i32
    %7 = arith.addi %6, %arg1 : i32
    %c128_i32 = arith.constant 128 : i32
    %8 = arith.muli %7, %c128_i32 : i32
    %9 = tpu.assume_multiple %8, 128 : i32
    %c0_4 = arith.constant 0 : index
    %10 = arith.index_cast %9 : i32 to index
    %11 = vector.load %arg2[%c0_4, %10] : memref<48x256xf32, #tpu.memory_space<vmem>>, vector<48x128xf32>
    %12 = arith.mulf %5, %11 : vector<48x128xf32>
    %c0_5 = arith.constant 0 : index
    %c0_6 = arith.constant 0 : index
    %13 = vector.load %arg7[%c0_5, %c0_6] : memref<48x128xf32, #tpu.memory_space<vmem>>, vector<48x128xf32>
    %14 = arith.addf %13, %12 : vector<48x128xf32>
    %c0_7 = arith.constant 0 : index
    %c0_8 = arith.constant 0 : index
    %15 = vector.load %arg7[%c0_7, %c0_8] : memref<48x128xf32, #tpu.memory_space<vmem>>, vector<48x128xf32>
    tpu.vector_store %arg7[%c0_7, %c0_8], %14 {strides = array<i32>} : memref<48x128xf32, #tpu.memory_space<vmem>>, vector<48x128xf32>,
    %c0_i32_9 = arith.constant 0 : i32
    %16 = arith.cmpi eq, %arg1, %c0_i32_9 : i32
    %17 = arith.extui %16 : i1 to i32
    %c0_i32_10 = arith.constant 0 : i32
    %18 = arith.cmpi ne, %17, %c0_i32_10 : i32
    scf.if %18 {
      %c0_11 = arith.constant 0 : index
      %c0_12 = arith.constant 0 : index
      %19 = vector.load %arg7[%c0_11, %c0_12] : memref<48x128xf32, #tpu.memory_space<vmem>>, vector<48x128xf32>
      %cst_13 = arith.constant dense<0.000000e+00> : vector<48xf32>
      %20 = vector.multi_reduction <add>, %19, %cst_13 [1] : vector<48x128xf32> to vector<48xf32>
      %21 = vector.shape_cast %20 : vector<48xf32> to vector<48x1xf32>
      %22 = vector.shape_cast %21 : vector<48x1xf32> to vector<48x1xf32>
      %23 = vector.broadcast %22 : vector<48x1xf32> to vector<48x128xf32>
      %c0_14 = arith.constant 0 : index
      %c0_15 = arith.constant 0 : index
      %24 = vector.load %arg3[%c0_14, %c0_15] : memref<16x48xf32, #tpu.memory_space<vmem>>, vector<16x48xf32>
      %cst_16 = arith.constant dense<0.000000e+00> : vector<16x128xf32>
      %25 = tpu.matmul %24, %23, %cst_16 {dimension_numbers = #tpu.dot_dimension_numbers<[1], [0], [0], [1], [0, 0, 1, 1], [], []>, precision = #tpu.contract_precision<fp32>} : vector<16x48xf32>, vector<48x128xf32>, vector<16x128xf32> -> vector<16x128xf32>
      %c0_17 = arith.constant 0 : index
      %c0_18 = arith.constant 0 : index
      %26 = vector.load %arg5[%c0_17, %c0_18] : memref<16x128xf32, #tpu.memory_space<vmem>>, vector<16x128xf32>
      tpu.vector_store %arg5[%c0_17, %c0_18], %25 {strides = array<i32>} : memref<16x128xf32, #tpu.memory_space<vmem>>, vector<16x128xf32>,
    } else {
    }
    return
  }
  func.func @transform_0(%arg0: i32, %arg1: i32) -> (i32, i32) {
    %c0_i32 = arith.constant 0 : i32
    %c0_i32_0 = arith.constant 0 : i32
    %c0_i32_1 = arith.constant 0 : i32
    return %c0_i32, %c0_i32_0 : i32, i32
  }
  func.func @transform_1(%arg0: i32, %arg1: i32) -> (i32, i32) {
    %c0_i32 = arith.constant 0 : i32
    %c0_i32_0 = arith.constant 0 : i32
    %c0_i32_1 = arith.constant 0 : i32
    return %c0_i32, %c0_i32_0 : i32, i32
  }
  func.func @transform_2(%arg0: i32, %arg1: i32) -> (i32, i32) {
    %c1_i32 = arith.constant 1 : i32
    %0 = arith.muli %arg0, %c1_i32 : i32
    %1 = arith.addi %0, %arg1 : i32
    %c0_i32 = arith.constant 0 : i32
    %c0_i32_0 = arith.constant 0 : i32
    return %c0_i32, %1 : i32, i32
  }
  func.func @transform_3(%arg0: i32, %arg1: i32) -> (i32, i32) {
    %c0_i32 = arith.constant 0 : i32
    %c0_i32_0 = arith.constant 0 : i32
    return %arg0, %c0_i32 : i32, i32
  }
}

</mosaic_0001>

<llo_original>
// kernel: tpu_custom_call.1
$region0: #{tpu_custom_call.1}
  #allocation0 [shape = 'u32[]', space=smem, size = 0x4, offset = 0x4, fixed_abs, tag = 'smem constant byte address 0x4 - core index']
  #allocation1 [shape = 'u32[72,128]{1,0:T(1,128)}', space=vmem, size = 0x9000, scoped, tag = 'internal scratch']
  #allocation2 [shape = 'bf16[48,256]{1,0:T(8,128)(2,1)}', space=vmem, size = 0x6000, scoped, tag = 'scratch operand']
  #allocation3 [shape = 'f32[48,128]{1,0:T(8,128)}', space=vmem, size = 0x6000, scoped, tag = 'scratch operand']
  %s0 = inlined_call_operand.hbm [shape: f32[48,256], index: 0, kind: input, shape index: {}]
  %s1 = inlined_call_operand.hbm [shape: f32[16,48], index: 1, kind: input, shape index: {}]
  %s2 = inlined_call_operand.hbm [shape: bf16[256,256], index: 2, kind: input, shape index: {}]
  %s3 = inlined_call_operand.hbm [shape: f32[32,128], index: 3, kind: output, shape index: {}]
  %s4 = sld [smem:[#allocation0]]
  $region65: #{tpu_custom_call.1} parent=0
    _
  %s6 = ssub.s32 1, %s4
  %s7 = scalar_select 0, %s6, %s4
  $region1: #{tpu_custom_call.1} parent=0
    #allocation4 [shape = 'u8[49152]{0}', space=vmem, size = 0xc000, scoped, tag = 'input window, operand 0, single buffered']
    #allocation5 [shape = 's32[2]{0}', space=sflag, size = 0x8, scoped, tag = 'scoped memory for tpu_custom_call.1']
    #allocation6 [shape = 's32[2]{0}', space=sflag, size = 0x8, scoped, tag = 'scoped memory for tpu_custom_call.1']
    #allocation7 [shape = 'u8[8192]{0}', space=vmem, size = 0x2000, scoped, tag = 'input window, operand 1, single buffered']
    #allocation8 [shape = 's32[1]{0}', space=sflag, size = 0x4, scoped, tag = 'scoped memory for tpu_custom_call.1']
    #allocation9 [shape = 'u8[131072]{0}', space=vmem, size = 0x20000, scoped, tag = 'input window, operand 2']
    #allocation10 [shape = 'u8[16384]{0}', space=vmem, size = 0x4000, scoped, tag = 'output window, operand 0']
    %8 = vsyncpa [#allocation5], 0
    %9 = vsyncpa [#allocation8], 0
    %10 = vsyncpa [#allocation6], 0
    %s11 = scalar_lea.sflag [#allocation6], 1
    %12 = vsyncpa %s11, 0
    loop: start=0, step=1, limit=4
    $region2: #{tpu_custom_call.1} parent=1 // loop_pre_header
      _
    $region3: #{tpu_custom_call.1} parent=1 // loop_header
      %s14 = sphi 0, %s18
      %p15 = scmp.ge.s32.totalorder %s14, 4
      %s21 = sphi 0, %s33
      %s22 = sphi 0, %s29
      %s23 = sphi 0, %s21
      %s24 = sphi 0, %s22
      %s25 = sphi 0, %s23
      %s26 = sphi 0, %s24
      %s34 = sphi 0, %s34
      %s36 = sphi 0, %s34
      %s37 = sphi 0, %s36
      %s51 = sphi 0, %s37
      %s55 = sphi 0, %s55
      %s57 = sphi 0, %s55
      %s58 = sphi 0, %s57
      %s72 = sphi 0, %s58
      %s80 = sphi 0, %s82
      %s83 = sphi 0, %s80
      %s84 = sphi 0, %s83
      %s100 = sphi 0, %s84
      %s106 = sphi 0, %s108
      %s109 = sphi 0, %s106
      %s110 = sphi 0, %s109
      %s126 = sphi 0, %s110
    $region4: #{tpu_custom_call.1} parent=1 // loop_header_branch
      %17 = sbr.rel (%p15) target = $region8
    $region5: #{tpu_custom_call.1} parent=1 // loop_body
      %s19 = ssub.s32 %s14, 1
      %s20 = ssub.s32 %s14, 2
      %s27 = sadd.s32 1, %s22
      %p28 = scmp.ge.s32.totalorder %s27, 1
      %s29 = scalar_select %p28, 0, %s27
      %s30 = sadd.s32 1, %s21
      %s31 = scalar_select %p28, %s30, %s21
      %p32 = scmp.ge.s32.totalorder %s31, 2
      %s33 = scalar_select %p32, 0, %s31
      %s35 = sadd.s32 %s34, 1
      %p38 = scmp.eq.s32.totalorder %s14, 1
      %p39 = scmp.ne.s32.totalorder %s34, %s36
      %p40 = scmp.eq.s32.totalorder %s14, 0
      %p41 = por %p39, %p40
      %p42 = scmp.ne.s32.totalorder %s34, %s36
      %p43 = scmp.eq.s32.totalorder %s19, 1
      %p44 = por %p42, %p43
      %p45 = scmp.ne.s32.totalorder %s36, %s37
      %p46 = scmp.eq.s32.totalorder %s19, 0
      %p47 = por %p45, %p46
      %p48 = scmp.ne.s32.totalorder %s36, %s37
      %p49 = scmp.eq.s32.totalorder %s20, 1
      %p50 = por %p48, %p49
      %p52 = scmp.ne.s32.totalorder %s37, %s51
      %p53 = scmp.eq.s32.totalorder %s20, 0
      %p54 = por %p52, %p53
      %s56 = sadd.s32 %s55, 1
      %p59 = scmp.eq.s32.totalorder %s14, 1
      %p60 = scmp.ne.s32.totalorder %s55, %s57
      %p61 = scmp.eq.s32.totalorder %s14, 0
      %p62 = por %p60, %p61
      %p63 = scmp.ne.s32.totalorder %s55, %s57
      %p64 = scmp.eq.s32.totalorder %s19, 1
      %p65 = por %p63, %p64
      %p66 = scmp.ne.s32.totalorder %s57, %s58
      %p67 = scmp.eq.s32.totalorder %s19, 0
      %p68 = por %p66, %p67
      %p69 = scmp.ne.s32.totalorder %s57, %s58
      %p70 = scmp.eq.s32.totalorder %s20, 1
      %p71 = por %p69, %p70
      %p73 = scmp.ne.s32.totalorder %s58, %s72
      %p74 = scmp.eq.s32.totalorder %s20, 0
      %p75 = por %p73, %p74
      %s76 = sadd.s32 %s21, %s22
      %s77 = sadd.s32 %s33, %s29
      %s78 = ssub.s32 %s76, %s77
      %p79 = scmp.eq.s32.totalorder %s78, 0
      %s81 = sadd.s32 %s80, 1
      %s82 = scalar_select %p79, %s80, %s81
      %p85 = pneg %p79
      %p86 = scmp.eq.s32.totalorder %s14, 1
      %p87 = por %p85, %p86
      %p88 = scmp.ne.s32.totalorder %s80, %s83
      %p89 = scmp.eq.s32.totalorder %s14, 0
      %p90 = por %p88, %p89
      %p91 = scmp.ne.s32.totalorder %s80, %s83
      %p92 = scmp.eq.s32.totalorder %s19, 1
      %p93 = por %p91, %p92
      %p94 = scmp.ne.s32.totalorder %s83, %s84
      %p95 = scmp.eq.s32.totalorder %s19, 0
      %p96 = por %p94, %p95
      %p97 = scmp.ne.s32.totalorder %s83, %s84
      %p98 = scmp.eq.s32.totalorder %s20, 1
      %p99 = por %p97, %p98
      %p101 = scmp.ne.s32.totalorder %s84, %s100
      %p102 = scmp.eq.s32.totalorder %s20, 0
      %p103 = por %p101, %p102
      %s104 = ssub.s32 %s21, %s33
      %p105 = scmp.eq.s32.totalorder %s104, 0
      %s107 = sadd.s32 %s106, 1
      %s108 = scalar_select %p105, %s106, %s107
      %p111 = pneg %p105
      %p112 = scmp.eq.s32.totalorder %s14, 1
      %p113 = por %p111, %p112
      %p114 = scmp.ne.s32.totalorder %s106, %s109
      %p115 = scmp.eq.s32.totalorder %s14, 0
      %p116 = por %p114, %p115
      %p117 = scmp.ne.s32.totalorder %s106, %s109
      %p118 = scmp.eq.s32.totalorder %s19, 1
      %p119 = por %p117, %p118
      %p120 = scmp.ne.s32.totalorder %s109, %s110
      %p121 = scmp.eq.s32.totalorder %s19, 0
      %p122 = por %p120, %p121
      %p123 = scmp.ne.s32.totalorder %s109, %s110
      %p124 = scmp.eq.s32.totalorder %s20, 1
      %p125 = por %p123, %p124
      %p127 = scmp.ne.s32.totalorder %s110, %s126
      %p128 = scmp.eq.s32.totalorder %s20, 0
      %p129 = por %p127, %p128
      %p130 = scmp.le.s32.totalorder 1, %s14
      %p131 = scmp.lt.s32.totalorder %s14, 3
      %p132 = pnand %p130, %p131
      %p133 = pneg %p132
      // Predicated region
      $region9: #{tpu_custom_call.1} parent=5 // pred_check
        _
      $region10: #{tpu_custom_call.1} parent=5 // pred_check_branch
        %135 = sbr.rel (%p132) target = $region12
      $region11: #{tpu_custom_call.1} parent=5 // pred_region
        %s136 = ssub.s32 %s14, 1
        // Predicated region
        $region13: #{tpu_custom_call.1} parent=11 // pred_check
          %p137 = pneg %p47
        $region14: #{tpu_custom_call.1} parent=11 // pred_check_branch
          %139 = sbr.rel (%p137) target = $region16
        $region15: #{tpu_custom_call.1} parent=11 // pred_region
          %141 = vsyncadd [#allocation5], 0
          %s142 = sshll.u32 %s0, 4
          %s143 = int_to_ptr.hbm [resolvable:$true] %s142
          %s144 = sshll.u32 [#allocation4], 4
          %s145 = int_to_ptr.vmem [resolvable:$true] %s144
          %150 = dma.hbm_to_vmem [thread:$0]  %s143, 1536, %s145, [#allocation5], 256, 256, 16
        $region16: #{tpu_custom_call.1} parent=11 // pred_fallthru
          _
        // Predicated region
        $region17: #{tpu_custom_call.1} parent=11 // pred_check
          %p151 = pneg %p68
        $region18: #{tpu_custom_call.1} parent=11 // pred_check_branch
          %153 = sbr.rel (%p151) target = $region20
        $region19: #{tpu_custom_call.1} parent=11 // pred_region
          %155 = vsyncadd [#allocation8], 0
          %s156 = sshll.u32 %s1, 4
          %s157 = int_to_ptr.hbm [resolvable:$true] %s156
          %s158 = sshll.u32 [#allocation7], 4
          %s159 = int_to_ptr.vmem [resolvable:$true] %s158
          %164 = dma.hbm_to_vmem [thread:$0]  %s157, 256, %s159, [#allocation8], 128, 128, 8
        $region20: #{tpu_custom_call.1} parent=11 // pred_fallthru
          _
      $region12: #{tpu_custom_call.1} parent=5 // pred_fallthru
        _
      %p165 = scmp.lt.s32.totalorder %s14, 2
      // Predicated region
      $region21: #{tpu_custom_call.1} parent=5 // pred_check
        %p166 = pneg %p165
      $region22: #{tpu_custom_call.1} parent=5 // pred_check_branch
        %168 = sbr.rel (%p166) target = $region24
      $region23: #{tpu_custom_call.1} parent=5 // pred_region
        // Predicated region
        $region25: #{tpu_custom_call.1} parent=23 // pred_check
          %p169 = pneg %p90
        $region26: #{tpu_custom_call.1} parent=23 // pred_check_branch
          %171 = sbr.rel (%p169) target = $region28
        $region27: #{tpu_custom_call.1} parent=23 // pred_region
          %s172 = sand.u32 %s14, 1
          %s173 = scalar_lea.sflag [#allocation5], %s172
          %s174 = sand.u32 %s80, 1
          %s175 = smul.addr %s174, 128
          %s176 = scalar_lea.vmem [#allocation9], %s175
          %s177 = sadd.s32 %s21, %s22
          %179 = vsyncadd %s173, 0
          %s180 = smul.addr %s177, 4
          %s181 = scalar_lea.hbm %s2, %s180
          %s182 = sshll.u32 %s181, 4
          %s183 = int_to_ptr.hbm [resolvable:$true] %s182
          %s184 = sshll.u32 %s176, 4
          %s185 = int_to_ptr.vmem [resolvable:$true] %s184
          %190 = dma.hbm_to_vmem [thread:$0]  %s183, 2048, %s185, %s173, 128, 64, 4
        $region28: #{tpu_custom_call.1} parent=23 // pred_fallthru
          _
      $region24: #{tpu_custom_call.1} parent=5 // pred_fallthru
        _
      %p191 = scmp.le.s32.totalorder 1, %s14
      %p192 = scmp.lt.s32.totalorder %s14, 3
      %p193 = pnand %p191, %p192
      %p194 = pneg %p193
      // Predicated region
      $region29: #{tpu_custom_call.1} parent=5 // pred_check
        _
      $region30: #{tpu_custom_call.1} parent=5 // pred_check_branch
        %196 = sbr.rel (%p193) target = $region32
      $region31: #{tpu_custom_call.1} parent=5 // pred_region
        %s197 = ssub.s32 %s14, 1
        // Predicated region
        $region33: #{tpu_custom_call.1} parent=31 // pred_check
          %p198 = pneg %p47
        $region34: #{tpu_custom_call.1} parent=31 // pred_check_branch
          %200 = sbr.rel (%p198) target = $region36
        $region35: #{tpu_custom_call.1} parent=31 // pred_region
          %202 = dma.done [#allocation5], 1536
        $region36: #{tpu_custom_call.1} parent=31 // pred_fallthru
          _
        // Predicated region
        $region37: #{tpu_custom_call.1} parent=31 // pred_check
          %p203 = pneg %p68
        $region38: #{tpu_custom_call.1} parent=31 // pred_check_branch
          %205 = sbr.rel (%p203) target = $region40
        $region39: #{tpu_custom_call.1} parent=31 // pred_region
          %207 = dma.done [#allocation8], 256
        $region40: #{tpu_custom_call.1} parent=31 // pred_fallthru
          _
        %s208 = sand.u32 %s19, 1
        %s209 = scalar_lea.sflag [#allocation5], %s208
        %s210 = sand.u32 %s83, 1
        %s211 = smul.addr %s210, 128
        %s212 = scalar_lea.vmem [#allocation9], %s211
        // Predicated region
        $region41: #{tpu_custom_call.1} parent=31 // pred_check
          %p213 = pneg %p96
        $region42: #{tpu_custom_call.1} parent=31 // pred_check_branch
          %215 = sbr.rel (%p213) target = $region44
        $region43: #{tpu_custom_call.1} parent=31 // pred_region
          %217 = dma.done %s209, 2048
        $region44: #{tpu_custom_call.1} parent=31 // pred_fallthru
          _
        %p218 = pneg %p47
        %p219 = pneg %p44
        %p220 = pneg %p68
        %p221 = pneg %p65
        %s222 = sand.u32 %s19, 1
        %s223 = scalar_lea.sflag [#allocation5], %s222
        %s224 = sand.u32 %s83, 1
        %s225 = smul.addr %s224, 128
        %s226 = scalar_lea.vmem [#allocation9], %s225
        %p227 = pneg %p96
        %p228 = pneg %p93
        %p229 = pneg %p122
        %p230 = pneg %p119
        %s231 = sand.u32 %s109, 1
        %s232 = scalar_lea.sflag [#allocation6], %s231
        %s233 = sand.u32 %s109, 1
        %s234 = smul.addr %s233, 16
        %s235 = scalar_lea.vmem [#allocation10], %s234
        %s236 = sadd.s32 %s23, %s24
        %s237 = smul.u32 2, %s23
        %p238 = scmp.eq.s32.totalorder %s24, 0
        // Predicated region
        $region45: #{tpu_custom_call.1} parent=31 // pred_check
          %p239 = pneg %p238
        $region46: #{tpu_custom_call.1} parent=31 // pred_check_branch
          %241 = sbr.rel (%p239) target = $region48
        $region47: #{tpu_custom_call.1} parent=31 // pred_region
          %242 = vst [vmem:[#allocation3] sm:$0xff] 0.0
          %243 = vst [vmem:[#allocation3 + $0x8] sm:$0xff] 0.0
          %244 = vst [vmem:[#allocation3 + $0x10] sm:$0xff] 0.0
          %245 = vst [vmem:[#allocation3 + $0x18] sm:$0xff] 0.0
          %246 = vst [vmem:[#allocation3 + $0x20] sm:$0xff] 0.0
          %247 = vst [vmem:[#allocation3 + $0x28] sm:$0xff] 0.0
          %v248 = vld [vmem:[#allocation4] sm:$0xff]
          %v249 = vld [vmem:[#allocation4 + $0x8] sm:$0xff]
          %v250 = vld [vmem:[#allocation4 + $0x10] sm:$0xff]
          %v251 = vld [vmem:[#allocation4 + $0x18] sm:$0xff]
          %v252 = vld [vmem:[#allocation4 + $0x20] sm:$0xff]
          %v253 = vld [vmem:[#allocation4 + $0x28] sm:$0xff]
          %v254 = vld [vmem:[#allocation4 + $0x30] sm:$0xff]
          %v255 = vld [vmem:[#allocation4 + $0x38] sm:$0xff]
          %v256 = vld [vmem:[#allocation4 + $0x40] sm:$0xff]
          %v257 = vld [vmem:[#allocation4 + $0x48] sm:$0xff]
          %v258 = vld [vmem:[#allocation4 + $0x50] sm:$0xff]
          %v259 = vld [vmem:[#allocation4 + $0x58] sm:$0xff]
          %v260 = vpack.c.bf16 %v249, %v248
          %v261 = vpack.c.bf16 %v251, %v250
          %v262 = vpack.c.bf16 %v253, %v252
          %v263 = vpack.c.bf16 %v255, %v254
          %v264 = vpack.c.bf16 %v257, %v256
          %v265 = vpack.c.bf16 %v259, %v258
          %266 = vst [vmem:[#allocation2] sm:$0xff] %v260
          %267 = vst [vmem:[#allocation2 + $0x8] sm:$0xff] %v261
          %268 = vst [vmem:[#allocation2 + $0x10] sm:$0xff] %v262
          %269 = vst [vmem:[#allocation2 + $0x18] sm:$0xff] %v263
          %270 = vst [vmem:[#allocation2 + $0x20] sm:$0xff] %v264
          %271 = vst [vmem:[#allocation2 + $0x28] sm:$0xff] %v265
        $region48: #{tpu_custom_call.1} parent=31 // pred_fallthru
          _
        %v272 = vld [vmem:[#allocation2] sm:$0xff]
        %v273 = vld [vmem:[#allocation2 + $0x8] sm:$0xff]
        %v274 = vld [vmem:[#allocation2 + $0x10] sm:$0xff]
        %v275 = vld [vmem:[#allocation2 + $0x18] sm:$0xff]
        %v276 = vld [vmem:[#allocation2 + $0x20] sm:$0xff]
        %v277 = vld [vmem:[#allocation2 + $0x28] sm:$0xff]
        %v278 = vld [vmem:[%s212] sm:$0xf]
        %v279 = vld [vmem:[%s212 + $0x4] sm:$0xf]
        %v280 = vld [vmem:[%s212 + $0x8] sm:$0xf]
        %v281 = vld [vmem:[%s212 + $0xc] sm:$0xf]
        %v282 = vld [vmem:[%s212 + $0x10] sm:$0xf]
        %v283 = vld [vmem:[%s212 + $0x14] sm:$0xf]
        %v284 = vld [vmem:[%s212 + $0x18] sm:$0xf]
        %v285 = vld [vmem:[%s212 + $0x1c] sm:$0xf]
        %v286 = vld [vmem:[%s212 + $0x20] sm:$0xf]
        %v287 = vld [vmem:[%s212 + $0x24] sm:$0xf]
        %v288 = vld [vmem:[%s212 + $0x28] sm:$0xf]
        %v289 = vld [vmem:[%s212 + $0x2c] sm:$0xf]
        %v290 = vld [vmem:[%s212 + $0x30] sm:$0xf]
        %v291 = vld [vmem:[%s212 + $0x34] sm:$0xf]
        %v292 = vld [vmem:[%s212 + $0x38] sm:$0xf]
        %v293 = vld [vmem:[%s212 + $0x3c] sm:$0xf]
        %v294 = vld [vmem:[%s212 + $0x40] sm:$0xf]
        %v295 = vld [vmem:[%s212 + $0x44] sm:$0xf]
        %v296 = vld [vmem:[%s212 + $0x48] sm:$0xf]
        %v297 = vld [vmem:[%s212 + $0x4c] sm:$0xf]
        %v298 = vld [vmem:[%s212 + $0x50] sm:$0xf]
        %v299 = vld [vmem:[%s212 + $0x54] sm:$0xf]
        %v300 = vld [vmem:[%s212 + $0x58] sm:$0xf]
        %v301 = vld [vmem:[%s212 + $0x5c] sm:$0xf]
        %v302 = vld [vmem:[%s212 + $0x60] sm:$0xf]
        %v303 = vld [vmem:[%s212 + $0x64] sm:$0xf]
        %v304 = vld [vmem:[%s212 + $0x68] sm:$0xf]
        %v305 = vld [vmem:[%s212 + $0x6c] sm:$0xf]
        %v306 = vld [vmem:[%s212 + $0x70] sm:$0xf]
        %v307 = vld [vmem:[%s212 + $0x74] sm:$0xf]
        %v308 = vld [vmem:[%s212 + $0x78] sm:$0xf]
        %v309 = vld [vmem:[%s212 + $0x7c] sm:$0xf]
        %v316 = vunpack.c.l.b16 %v272
        %v317 = vunpack.c.h.b16 %v272
        %v318 = vunpack.c.l.b16 %v273
        %v319 = vunpack.c.h.b16 %v273
        %v320 = vunpack.c.l.b16 %v274
        %v321 = vunpack.c.h.b16 %v274
        %v322 = vunpack.c.l.b16 %v275
        %v323 = vunpack.c.h.b16 %v275
        %v324 = vunpack.c.l.b16 %v276
        %v325 = vunpack.c.h.b16 %v276
        %v326 = vunpack.c.l.b16 %v277
        %v327 = vunpack.c.h.b16 %v277
        %v328 = vpack.c.b16 %v318, %v316
        %v329 = vpack.c.b16 %v319, %v317
        %v330 = vpack.c.b16 %v322, %v320
        %v331 = vpack.c.b16 %v323, %v321
        %v332 = vpack.c.b16 %v326, %v324
        %v333 = vpack.c.b16 %v327, %v325
        %v372 = vunpack.c.l.b16 %v278
        %v373 = vunpack.c.l.b16 %v279
        %v374 = vunpack.c.l.b16 %v280
        %v375 = vunpack.c.l.b16 %v281
        %v376 = vunpack.c.l.b16 %v282
        %v377 = vunpack.c.l.b16 %v283
        %v378 = vunpack.c.l.b16 %v284
        %v379 = vunpack.c.l.b16 %v285
        %v380 = vunpack.c.l.b16 %v286
        %v381 = vunpack.c.l.b16 %v287
        %v382 = vunpack.c.l.b16 %v288
        %v383 = vunpack.c.l.b16 %v289
        %v384 = vunpack.c.l.b16 %v290
        %v385 = vunpack.c.l.b16 %v291
        %v386 = vunpack.c.l.b16 %v292
        %v387 = vunpack.c.l.b16 %v293
        %v388 = vunpack.c.l.b16 %v294
        %v389 = vunpack.c.l.b16 %v295
        %v390 = vunpack.c.l.b16 %v296
        %v391 = vunpack.c.l.b16 %v297
        %v392 = vunpack.c.l.b16 %v298
        %v393 = vunpack.c.l.b16 %v299
        %v394 = vunpack.c.l.b16 %v300
        %v395 = vunpack.c.l.b16 %v301
        %v396 = vunpack.c.l.b16 %v302
        %v397 = vunpack.c.l.b16 %v303
        %v398 = vunpack.c.l.b16 %v304
        %v399 = vunpack.c.l.b16 %v305
        %v400 = vunpack.c.l.b16 %v306
        %v401 = vunpack.c.l.b16 %v307
        %v402 = vunpack.c.l.b16 %v308
        %v403 = vunpack.c.l.b16 %v309
        %v404 = vpack.c.b16 %v373, %v372
        %v405 = vpack.c.b16 %v375, %v374
        %v406 = vpack.c.b16 %v377, %v376
        %v407 = vpack.c.b16 %v379, %v378
        %v408 = vpack.c.b16 %v381, %v380
        %v409 = vpack.c.b16 %v383, %v382
        %v410 = vpack.c.b16 %v385, %v384
        %v411 = vpack.c.b16 %v387, %v386
        %v412 = vpack.c.b16 %v389, %v388
        %v413 = vpack.c.b16 %v391, %v390
        %v414 = vpack.c.b16 %v393, %v392
        %v415 = vpack.c.b16 %v395, %v394
        %v416 = vpack.c.b16 %v397, %v396
        %v417 = vpack.c.b16 %v399, %v398
        %v418 = vpack.c.b16 %v401, %v400
        %v419 = vpack.c.b16 %v403, %v402
        %436 = vmatpush.bf16.msra.mxu0 %v411
        %437 = vmatpush.bf16.msra.mxu0 %v410
        %438 = vmatpush.bf16.msra.mxu0 %v409
        %439 = vmatpush.bf16.msra.mxu0 %v408
        %440 = vmatpush.bf16.msra.mxu0 %v407
        %441 = vmatpush.bf16.msra.mxu0 %v406
        %442 = vmatpush.bf16.msra.mxu0 %v405
        %443 = vmatpush.bf16.msra.mxu0 %v404
        %444 = vmatmul.bf16.gmra.mxu0 %v328
        %v445 = vpop.f32.mrf.mxu0
        %v446 = vadd.f32 0.0, %v445
        %v447 = vpop.f32.mrf.mxu0
        %v448 = vadd.f32 0.0, %v447
        %449 = vmatmul.bf16.gmra.mxu0 %v330
        %v450 = vpop.f32.mrf.mxu0
        %v451 = vadd.f32 0.0, %v450
        %v452 = vpop.f32.mrf.mxu0
        %v453 = vadd.f32 0.0, %v452
        %454 = vmatmul.bf16.gmra.mxu0 %v332
        %v455 = vpop.f32.mrf.mxu0
        %v456 = vadd.f32 0.0, %v455
        %v457 = vpop.f32.mrf.mxu0
        %v458 = vadd.f32 0.0, %v457
        %459 = vdwg.mxu0
        %460 = vmatpush.bf16.msra.mxu0 %v419
        %461 = vmatpush.bf16.msra.mxu0 %v418
        %462 = vmatpush.bf16.msra.mxu0 %v417
        %463 = vmatpush.bf16.msra.mxu0 %v416
        %464 = vmatpush.bf16.msra.mxu0 %v415
        %465 = vmatpush.bf16.msra.mxu0 %v414
        %466 = vmatpush.bf16.msra.mxu0 %v413
        %467 = vmatpush.bf16.msra.mxu0 %v412
        %468 = vmatmul.bf16.gmra.mxu0 %v329
        %v469 = vpop.f32.mrf.mxu0
        %v470 = vadd.f32 %v446, %v469
        %v471 = vpop.f32.mrf.mxu0
        %v472 = vadd.f32 %v448, %v471
        %473 = vmatmul.bf16.gmra.mxu0 %v331
        %v474 = vpop.f32.mrf.mxu0
        %v475 = vadd.f32 %v451, %v474
        %v476 = vpop.f32.mrf.mxu0
        %v477 = vadd.f32 %v453, %v476
        %478 = vmatmul.bf16.gmra.mxu0 %v333
        %v479 = vpop.f32.mrf.mxu0
        %v480 = vadd.f32 %v456, %v479
        %v481 = vpop.f32.mrf.mxu0
        %v482 = vadd.f32 %v458, %v481
        %483 = vdwg.mxu0
        %s484 = sadd.s32 %s23, %s24
        %s485 = smul.u32 %s484, 128
        %s486 = sshra.s32 %s485, 7
        %s487 = sand.u32 %s485, 127
        %s488 = smul.addr %s486, 8
        %s489 = scalar_lea.vmem [#allocation4], %s488
        %v490 = vld [vmem:[%s489] sm:$0xff]
        %v491 = vld [vmem:[%s489 + $0x10] sm:$0xff]
        %v492 = vld [vmem:[%s489 + $0x20] sm:$0xff]
        %v493 = vld [vmem:[%s489 + $0x30] sm:$0xff]
        %v494 = vld [vmem:[%s489 + $0x40] sm:$0xff]
        %v495 = vld [vmem:[%s489 + $0x50] sm:$0xff]
        %v496 = vmul.f32 %v470, %v490
        %v497 = vmul.f32 %v472, %v491
        %v498 = vmul.f32 %v475, %v492
        %v499 = vmul.f32 %v477, %v493
        %v500 = vmul.f32 %v480, %v494
        %v501 = vmul.f32 %v482, %v495
        %v502 = vld [vmem:[#allocation3] sm:$0xff]
        %v503 = vld [vmem:[#allocation3 + $0x8] sm:$0xff]
        %v504 = vld [vmem:[#allocation3 + $0x10] sm:$0xff]
        %v505 = vld [vmem:[#allocation3 + $0x18] sm:$0xff]
        %v506 = vld [vmem:[#allocation3 + $0x20] sm:$0xff]
        %v507 = vld [vmem:[#allocation3 + $0x28] sm:$0xff]
        %v508 = vadd.f32 %v502, %v496
        %v509 = vadd.f32 %v503, %v497
        %v510 = vadd.f32 %v504, %v498
        %v511 = vadd.f32 %v505, %v499
        %v512 = vadd.f32 %v506, %v500
        %v513 = vadd.f32 %v507, %v501
        %514 = vst [vmem:[#allocation3] sm:$0xff] %v508
        %515 = vst [vmem:[#allocation3 + $0x8] sm:$0xff] %v509
        %516 = vst [vmem:[#allocation3 + $0x10] sm:$0xff] %v510
        %517 = vst [vmem:[#allocation3 + $0x18] sm:$0xff] %v511
        %518 = vst [vmem:[#allocation3 + $0x20] sm:$0xff] %v512
        %519 = vst [vmem:[#allocation3 + $0x28] sm:$0xff] %v513
        // Predicated region
        $region49: #{tpu_custom_call.1} parent=31 // pred_check
          %p520 = pneg %p238
        $region50: #{tpu_custom_call.1} parent=31 // pred_check_branch
          %522 = sbr.rel (%p520) target = $region52
        $region51: #{tpu_custom_call.1} parent=31 // pred_region
          %v523 = vld [vmem:[#allocation3] sm:$0xff]
          %v524 = vld [vmem:[#allocation3 + $0x8] sm:$0xff]
          %v525 = vld [vmem:[#allocation3 + $0x10] sm:$0xff]
          %v526 = vld [vmem:[#allocation3 + $0x18] sm:$0xff]
          %v527 = vld [vmem:[#allocation3 + $0x20] sm:$0xff]
          %v528 = vld [vmem:[#allocation3 + $0x28] sm:$0xff]
          %529 = vadd.xlane.f32.xlu0 %v523
          %v530 = vpop.xlane.xlu0 %529
          %531 = vadd.xlane.f32.xlu0 %v524
          %v532 = vpop.xlane.xlu0 %531
          %533 = vadd.xlane.f32.xlu0 %v525
          %v534 = vpop.xlane.xlu0 %533
          %535 = vadd.xlane.f32.xlu0 %v526
          %v536 = vpop.xlane.xlu0 %535
          %537 = vadd.xlane.f32.xlu0 %v527
          %v538 = vpop.xlane.xlu0 %537
          %539 = vadd.xlane.f32.xlu0 %v528
          %v540 = vpop.xlane.xlu0 %539
          %v541 = vld [vmem:[#allocation7] sm:$0xff]
          %v542 = vld [vmem:[#allocation7 + $0x8] sm:$0xff]
          %vm543 = vcmask 392192
          %v545 = vsel %vm543, %v541, 0
          %v548 = vsel %vm543, %v542, 0
          %550 = vmatpush.msra.mxu0 0.0
          %551 = vmatpush.msra.mxu0 0.0
          %552 = vmatpush.msra.mxu0 0.0
          %553 = vmatpush.msra.mxu0 0.0
          %554 = vmatpush.msra.mxu0 0.0
          %555 = vmatpush.msra.mxu0 0.0
          %556 = vmatpush.msra.mxu0 0.0
          %557 = vmatpush.msra.mxu0 0.0
          %558 = vmatpush.msra.mxu0 0.0
          %559 = vmatpush.msra.mxu0 0.0
          %v560 = vand.u32 %v540, 4294901760
          %561 = vmatpush.msra.mxu0 %v560
          %v562 = vand.u32 %v538, 4294901760
          %563 = vmatpush.msra.mxu0 %v562
          %v564 = vand.u32 %v536, 4294901760
          %565 = vmatpush.msra.mxu0 %v564
          %v566 = vand.u32 %v534, 4294901760
          %567 = vmatpush.msra.mxu0 %v566
          %v568 = vand.u32 %v532, 4294901760
          %569 = vmatpush.msra.mxu0 %v568
          %v570 = vand.u32 %v530, 4294901760
          %571 = vmatpush.msra.mxu0 %v570
          %v572 = vand.u32 %v545, 4294901760
          %v573 = vsub.f32 %v545, %v572
          %v574 = vand.u32 %v573, 4294901760
          %v575 = vsub.f32 %v573, %v574
          %v576 = vand.u32 %v575, 4294901760
          %577 = vmatmul.f32.gmra.mxu0 %v576
          %v578 = vpop.f32.mrf.mxu0
          %v579 = vadd.f32 0.0, %v578
          %v580 = vand.u32 %v548, 4294901760
          %v581 = vsub.f32 %v548, %v580
          %v582 = vand.u32 %v581, 4294901760
          %v583 = vsub.f32 %v581, %v582
          %v584 = vand.u32 %v583, 4294901760
          %585 = vmatmul.f32.gmra.mxu0 %v584
          %v586 = vpop.f32.mrf.mxu0
          %v587 = vadd.f32 0.0, %v586
          %588 = vdwg.mxu0
          %589 = vmatpush.msra.mxu0 0.0
          %590 = vmatpush.msra.mxu0 0.0
          %591 = vmatpush.msra.mxu0 0.0
          %592 = vmatpush.msra.mxu0 0.0
          %593 = vmatpush.msra.mxu0 0.0
          %594 = vmatpush.msra.mxu0 0.0
          %595 = vmatpush.msra.mxu0 0.0
          %596 = vmatpush.msra.mxu0 0.0
          %597 = vmatpush.msra.mxu0 0.0
          %598 = vmatpush.msra.mxu0 0.0
          %v599 = vand.u32 %v540, 4294901760
          %v600 = vsub.f32 %v540, %v599
          %v601 = vand.u32 %v600, 4294901760
          %v602 = vsub.f32 %v600, %v601
          %v603 = vand.u32 %v602, 4294901760
          %604 = vmatpush.msra.mxu0 %v603
          %v605 = vand.u32 %v538, 4294901760
          %v606 = vsub.f32 %v538, %v605
          %v607 = vand.u32 %v606, 4294901760
          %v608 = vsub.f32 %v606, %v607
          %v609 = vand.u32 %v608, 4294901760
          %610 = vmatpush.msra.mxu0 %v609
          %v611 = vand.u32 %v536, 4294901760
          %v612 = vsub.f32 %v536, %v611
          %v613 = vand.u32 %v612, 4294901760
          %v614 = vsub.f32 %v612, %v613
          %v615 = vand.u32 %v614, 4294901760
          %616 = vmatpush.msra.mxu0 %v615
          %v617 = vand.u32 %v534, 4294901760
          %v618 = vsub.f32 %v534, %v617
          %v619 = vand.u32 %v618, 4294901760
          %v620 = vsub.f32 %v618, %v619
          %v621 = vand.u32 %v620, 4294901760
          %622 = vmatpush.msra.mxu0 %v621
          %v623 = vand.u32 %v532, 4294901760
          %v624 = vsub.f32 %v532, %v623
          %v625 = vand.u32 %v624, 4294901760
          %v626 = vsub.f32 %v624, %v625
          %v627 = vand.u32 %v626, 4294901760
          %628 = vmatpush.msra.mxu0 %v627
          %v629 = vand.u32 %v530, 4294901760
          %v630 = vsub.f32 %v530, %v629
          %v631 = vand.u32 %v630, 4294901760
          %v632 = vsub.f32 %v630, %v631
          %v633 = vand.u32 %v632, 4294901760
          %634 = vmatpush.msra.mxu0 %v633
          %v635 = vand.u32 %v545, 4294901760
          %636 = vmatmul.f32.gmra.mxu0 %v635
          %v637 = vpop.f32.mrf.mxu0
          %v638 = vadd.f32 %v579, %v637
          %v639 = vand.u32 %v548, 4294901760
          %640 = vmatmul.f32.gmra.mxu0 %v639
          %v641 = vpop.f32.mrf.mxu0
          %v642 = vadd.f32 %v587, %v641
          %643 = vdwg.mxu0
          %644 = vmatpush.msra.mxu0 0.0
          %645 = vmatpush.msra.mxu0 0.0
          %646 = vmatpush.msra.mxu0 0.0
          %647 = vmatpush.msra.mxu0 0.0
          %648 = vmatpush.msra.mxu0 0.0
          %649 = vmatpush.msra.mxu0 0.0
          %650 = vmatpush.msra.mxu0 0.0
          %651 = vmatpush.msra.mxu0 0.0
          %652 = vmatpush.msra.mxu0 0.0
          %653 = vmatpush.msra.mxu0 0.0
          %v654 = vand.u32 %v540, 4294901760
          %v655 = vsub.f32 %v540, %v654
          %656 = vmatpush.msra.mxu0 %v655
          %v657 = vand.u32 %v538, 4294901760
          %v658 = vsub.f32 %v538, %v657
          %659 = vmatpush.msra.mxu0 %v658
          %v660 = vand.u32 %v536, 4294901760
          %v661 = vsub.f32 %v536, %v660
          %662 = vmatpush.msra.mxu0 %v661
          %v663 = vand.u32 %v534, 4294901760
          %v664 = vsub.f32 %v534, %v663
          %665 = vmatpush.msra.mxu0 %v664
          %v666 = vand.u32 %v532, 4294901760
          %v667 = vsub.f32 %v532, %v666
          %668 = vmatpush.msra.mxu0 %v667
          %v669 = vand.u32 %v530, 4294901760
          %v670 = vsub.f32 %v530, %v669
          %671 = vmatpush.msra.mxu0 %v670
          %v672 = vand.u32 %v545, 4294901760
          %v673 = vsub.f32 %v545, %v672
          %674 = vmatmul.f32.gmra.mxu0 %v673
          %v675 = vpop.f32.mrf.mxu0
          %v676 = vadd.f32 %v638, %v675
          %v677 = vand.u32 %v548, 4294901760
          %v678 = vsub.f32 %v548, %v677
          %679 = vmatmul.f32.gmra.mxu0 %v678
          %v680 = vpop.f32.mrf.mxu0
          %v681 = vadd.f32 %v642, %v680
          %682 = vdwg.mxu0
          %683 = vmatpush.msra.mxu0 0.0
          %684 = vmatpush.msra.mxu0 0.0
          %685 = vmatpush.msra.mxu0 0.0
          %686 = vmatpush.msra.mxu0 0.0
          %687 = vmatpush.msra.mxu0 0.0
          %688 = vmatpush.msra.mxu0 0.0
          %689 = vmatpush.msra.mxu0 0.0
          %690 = vmatpush.msra.mxu0 0.0
          %691 = vmatpush.msra.mxu0 0.0
          %692 = vmatpush.msra.mxu0 0.0
          %v693 = vand.u32 %v540, 4294901760
          %694 = vmatpush.msra.mxu0 %v693
          %v695 = vand.u32 %v538, 4294901760
          %696 = vmatpush.msra.mxu0 %v695
          %v697 = vand.u32 %v536, 4294901760
          %698 = vmatpush.msra.mxu0 %v697
          %v699 = vand.u32 %v534, 4294901760
          %700 = vmatpush.msra.mxu0 %v699
          %v701 = vand.u32 %v532, 4294901760
          %702 = vmatpush.msra.mxu0 %v701
          %v703 = vand.u32 %v530, 4294901760
          %704 = vmatpush.msra.mxu0 %v703
          %v705 = vand.u32 %v545, 4294901760
          %v706 = vsub.f32 %v545, %v705
          %v707 = vand.u32 %v706, 4294901760
          %708 = vmatmul.f32.gmra.mxu0 %v707
          %v709 = vpop.f32.mrf.mxu0
          %v710 = vadd.f32 %v676, %v709
          %v711 = vand.u32 %v548, 4294901760
          %v712 = vsub.f32 %v548, %v711
          %v713 = vand.u32 %v712, 4294901760
          %714 = vmatmul.f32.gmra.mxu0 %v713
          %v715 = vpop.f32.mrf.mxu0
          %v716 = vadd.f32 %v681, %v715
          %717 = vdwg.mxu0
          %718 = vmatpush.msra.mxu0 0.0
          %719 = vmatpush.msra.mxu0 0.0
          %720 = vmatpush.msra.mxu0 0.0
          %721 = vmatpush.msra.mxu0 0.0
          %722 = vmatpush.msra.mxu0 0.0
          %723 = vmatpush.msra.mxu0 0.0
          %724 = vmatpush.msra.mxu0 0.0
          %725 = vmatpush.msra.mxu0 0.0
          %726 = vmatpush.msra.mxu0 0.0
          %727 = vmatpush.msra.mxu0 0.0
          %v728 = vand.u32 %v540, 4294901760
          %v729 = vsub.f32 %v540, %v728
          %v730 = vand.u32 %v729, 4294901760
          %731 = vmatpush.msra.mxu0 %v730
          %v732 = vand.u32 %v538, 4294901760
          %v733 = vsub.f32 %v538, %v732
          %v734 = vand.u32 %v733, 4294901760
          %735 = vmatpush.msra.mxu0 %v734
          %v736 = vand.u32 %v536, 4294901760
          %v737 = vsub.f32 %v536, %v736
          %v738 = vand.u32 %v737, 4294901760
          %739 = vmatpush.msra.mxu0 %v738
          %v740 = vand.u32 %v534, 4294901760
          %v741 = vsub.f32 %v534, %v740
          %v742 = vand.u32 %v741, 4294901760
          %743 = vmatpush.msra.mxu0 %v742
          %v744 = vand.u32 %v532, 4294901760
          %v745 = vsub.f32 %v532, %v744
          %v746 = vand.u32 %v745, 4294901760
          %747 = vmatpush.msra.mxu0 %v746
          %v748 = vand.u32 %v530, 4294901760
          %v749 = vsub.f32 %v530, %v748
          %v750 = vand.u32 %v749, 4294901760
          %751 = vmatpush.msra.mxu0 %v750
          %v752 = vand.u32 %v545, 4294901760
          %753 = vmatmul.f32.gmra.mxu0 %v752
          %v754 = vpop.f32.mrf.mxu0
          %v755 = vadd.f32 %v710, %v754
          %v756 = vand.u32 %v548, 4294901760
          %757 = vmatmul.f32.gmra.mxu0 %v756
          %v758 = vpop.f32.mrf.mxu0
          %v759 = vadd.f32 %v716, %v758
          %760 = vdwg.mxu0
          %761 = vmatpush.msra.mxu0 0.0
          %762 = vmatpush.msra.mxu0 0.0
          %763 = vmatpush.msra.mxu0 0.0
          %764 = vmatpush.msra.mxu0 0.0
          %765 = vmatpush.msra.mxu0 0.0
          %766 = vmatpush.msra.mxu0 0.0
          %767 = vmatpush.msra.mxu0 0.0
          %768 = vmatpush.msra.mxu0 0.0
          %769 = vmatpush.msra.mxu0 0.0
          %770 = vmatpush.msra.mxu0 0.0
          %v771 = vand.u32 %v540, 4294901760
          %772 = vmatpush.msra.mxu0 %v771
          %v773 = vand.u32 %v538, 4294901760
          %774 = vmatpush.msra.mxu0 %v773
          %v775 = vand.u32 %v536, 4294901760
          %776 = vmatpush.msra.mxu0 %v775
          %v777 = vand.u32 %v534, 4294901760
          %778 = vmatpush.msra.mxu0 %v777
          %v779 = vand.u32 %v532, 4294901760
          %780 = vmatpush.msra.mxu0 %v779
          %v781 = vand.u32 %v530, 4294901760
          %782 = vmatpush.msra.mxu0 %v781
          %v783 = vand.u32 %v545, 4294901760
          %784 = vmatmul.f32.gmra.mxu0 %v783
          %v785 = vpop.f32.mrf.mxu0
          %v786 = vadd.f32 %v755, %v785
          %v787 = vand.u32 %v548, 4294901760
          %788 = vmatmul.f32.gmra.mxu0 %v787
          %v789 = vpop.f32.mrf.mxu0
          %v790 = vadd.f32 %v759, %v789
          %791 = vdwg.mxu0
          %792 = vst [vmem:[%s235] sm:$0xff] %v786
          %793 = vst [vmem:[%s235 + $0x8] sm:$0xff] %v790
        $region52: #{tpu_custom_call.1} parent=31 // pred_fallthru
          _
        %s794 = sand.u32 %s109, 1
        %s795 = scalar_lea.sflag [#allocation6], %s794
        %s796 = sand.u32 %s109, 1
        %s797 = smul.addr %s796, 16
        %s798 = scalar_lea.vmem [#allocation10], %s797
        // Predicated region
        $region53: #{tpu_custom_call.1} parent=31 // pred_check
          %p799 = pneg %p119
        $region54: #{tpu_custom_call.1} parent=31 // pred_check_branch
          %801 = sbr.rel (%p799) target = $region56
        $region55: #{tpu_custom_call.1} parent=31 // pred_region
          %s802 = smul.u32 2, %s23
          %804 = vsyncadd %s795, 0
          %s805 = smul.addr %s802, 8
          %s806 = scalar_lea.hbm %s3, %s805
          %s807 = sshll.u32 %s798, 4
          %s808 = int_to_ptr.vmem [resolvable:$true] %s807
          %s809 = sshll.u32 %s806, 4
          %s810 = int_to_ptr.hbm [resolvable:$true] %s809
          %815 = dma.vmem_to_hbm [thread:$0]  %s808, 256, %s810, %s795, 128, 128, 8
        $region56: #{tpu_custom_call.1} parent=31 // pred_fallthru
          _
      $region32: #{tpu_custom_call.1} parent=5 // pred_fallthru
        _
      %p816 = scmp.le.s32.totalorder 2, %s14
      // Predicated region
      $region57: #{tpu_custom_call.1} parent=5 // pred_check
        %p817 = pneg %p816
      $region58: #{tpu_custom_call.1} parent=5 // pred_check_branch
        %819 = sbr.rel (%p817) target = $region60
      $region59: #{tpu_custom_call.1} parent=5 // pred_region
        %s820 = ssub.s32 %s14, 2
        // Predicated region
        $region61: #{tpu_custom_call.1} parent=59 // pred_check
          %p821 = pneg %p125
        $region62: #{tpu_custom_call.1} parent=59 // pred_check_branch
          %823 = sbr.rel (%p821) target = $region64
        $region63: #{tpu_custom_call.1} parent=59 // pred_region
          %s824 = sand.u32 %s110, 1
          %s825 = scalar_lea.sflag [#allocation6], %s824
          %s826 = sand.u32 %s110, 1
          %s827 = smul.addr %s826, 16
          %s828 = scalar_lea.vmem [#allocation10], %s827
          %830 = dma.done %s825, 256
        $region64: #{tpu_custom_call.1} parent=59 // pred_fallthru
          _
      $region60: #{tpu_custom_call.1} parent=5 // pred_fallthru
        _
    $region6: #{tpu_custom_call.1} parent=1 // loop_footer
      %s18 = sadd.s32 1, %s14
    $region7: #{tpu_custom_call.1} parent=1 // loop_footer_branch
      %13 = sbr.rel target = $region3
    $region8: #{tpu_custom_call.1} parent=1 // loop_exit
      _
    %831 = vsyncpa [#allocation5], 1
    %s832 = scalar_lea.sflag [#allocation5], 1
    %833 = vsyncpa %s832, 1
    %834 = vsyncpa [#allocation8], 1
    %835 = vsyncpa [#allocation6], 1
    %s836 = scalar_lea.sflag [#allocation6], 1
    %837 = vsyncpa %s836, 1

// kernel: tpu_custom_call.1
$region0: #{tpu_custom_call.1}
  #allocation0 [shape = 'u32[]', space=smem, size = 0x4, offset = 0x4, fixed_abs, tag = 'smem constant byte address 0x4 - core index']
  #allocation1 [shape = 'u32[72,128]{1,0:T(1,128)}', space=vmem, size = 0x9000, scoped, tag = 'internal scratch']
  #allocation2 [shape = 'bf16[48,256]{1,0:T(8,128)(2,1)}', space=vmem, size = 0x6000, scoped, tag = 'scratch operand']
  #allocation3 [shape = 'f32[48,128]{1,0:T(8,128)}', space=vmem, size = 0x6000, scoped, tag = 'scratch operand']
  %s0 = inlined_call_operand.hbm [shape: f32[48,256], index: 0, kind: input, shape index: {}]
  %s1 = inlined_call_operand.hbm [shape: f32[16,48], index: 1, kind: input, shape index: {}]
  %s2 = inlined_call_operand.hbm [shape: bf16[256,256], index: 2, kind: input, shape index: {}]
  %s3 = inlined_call_operand.hbm [shape: f32[32,128], index: 3, kind: output, shape index: {}]
  %s4 = sld [smem:[#allocation0]]
  $region65: #{tpu_custom_call.1} parent=0
    _
  %s6 = ssub.s32 1, %s4
  %s7 = scalar_select 0, %s6, %s4
  $region1: #{tpu_custom_call.1} parent=0
    #allocation4 [shape = 'u8[49152]{0}', space=vmem, size = 0xc000, scoped, tag = 'input window, operand 0, single buffered']
    #allocation5 [shape = 's32[2]{0}', space=sflag, size = 0x8, scoped, tag = 'scoped memory for tpu_custom_call.1']
    #allocation6 [shape = 's32[2]{0}', space=sflag, size = 0x8, scoped, tag = 'scoped memory for tpu_custom_call.1']
    #allocation7 [shape = 'u8[8192]{0}', space=vmem, size = 0x2000, scoped, tag = 'input window, operand 1, single buffered']
    #allocation8 [shape = 's32[1]{0}', space=sflag, size = 0x4, scoped, tag = 'scoped memory for tpu_custom_call.1']
    #allocation9 [shape = 'u8[131072]{0}', space=vmem, size = 0x20000, scoped, tag = 'input window, operand 2']
    #allocation10 [shape = 'u8[16384]{0}', space=vmem, size = 0x4000, scoped, tag = 'output window, operand 0']
    %8 = vsyncpa [#allocation5], 0
    %9 = vsyncpa [#allocation8], 0
    %10 = vsyncpa [#allocation6], 0
    %s11 = scalar_lea.sflag [#allocation6], 1
    %12 = vsyncpa %s11, 0
    loop: start=0, step=1, limit=4
    $region2: #{tpu_custom_call.1} parent=1 // loop_pre_header
      _
    $region3: #{tpu_custom_call.1} parent=1 // loop_header
      %s14 = sphi 0, %s18
      %p15 = scmp.ge.s32.totalorder %s14, 4
      %s21 = sphi 0, %s33
      %s22 = sphi 0, %s29
      %s23 = sphi 0, %s21
      %s24 = sphi 0, %s22
      %s25 = sphi 0, %s23
      %s26 = sphi 0, %s24
      %s34 = sphi 0, %s34
      %s36 = sphi 0, %s34
      %s37 = sphi 0, %s36
      %s51 = sphi 0, %s37
      %s55 = sphi 0, %s55
      %s57 = sphi 0, %s55
      %s58 = sphi 0, %s57
      %s72 = sphi 0, %s58
      %s80 = sphi 0, %s82
      %s83 = sphi 0, %s80
      %s84 = sphi 0, %s83
      %s100 = sphi 0, %s84
      %s106 = sphi 0, %s108
      %s109 = sphi 0, %s106
      %s110 = sphi 0, %s109
      %s126 = sphi 0, %s110
    $region4: #{tpu_custom_call.1} parent=1 // loop_header_branch
      %17 = sbr.rel (%p15) target = $region8
    $region5: #{tpu_custom_call.1} parent=1 // loop_body
      %s19 = ssub.s32 %s14, 1
      %s20 = ssub.s32 %s14, 2
      %s27 = sadd.s32 1, %s22
      %p28 = scmp.ge.s32.totalorder %s27, 1
      %s29 = scalar_select %p28, 0, %s27
      %s30 = sadd.s32 1, %s21
      %s31 = scalar_select %p28, %s30, %s21
      %p32 = scmp.ge.s32.totalorder %s31, 2
      %s33 = scalar_select %p32, 0, %s31
      %s35 = sadd.s32 %s34, 1
      %p38 = scmp.eq.s32.totalorder %s14, 1
      %p39 = scmp.ne.s32.totalorder %s34, %s36
      %p40 = scmp.eq.s32.totalorder %s14, 0
      %p41 = por %p39, %p40
      %p42 = scmp.ne.s32.totalorder %s34, %s36
      %p43 = scmp.eq.s32.totalorder %s19, 1
      %p44 = por %p42, %p43
      %p45 = scmp.ne.s32.totalorder %s36, %s37
      %p46 = scmp.eq.s32.totalorder %s19, 0
      %p47 = por %p45, %p46
      %p48 = scmp.ne.s32.totalorder %s36, %s37
      %p49 = scmp.eq.s32.totalorder %s20, 1
      %p50 = por %p48, %p49
      %p52 = scmp.ne.s32.totalorder %s37, %s51
      %p53 = scmp.eq.s32.totalorder %s20, 0
      %p54 = por %p52, %p53
      %s56 = sadd.s32 %s55, 1
      %p59 = scmp.eq.s32.totalorder %s14, 1
      %p60 = scmp.ne.s32.totalorder %s55, %s57
      %p61 = scmp.eq.s32.totalorder %s14, 0
      %p62 = por %p60, %p61
      %p63 = scmp.ne.s32.totalorder %s55, %s57
      %p64 = scmp.eq.s32.totalorder %s19, 1
      %p65 = por %p63, %p64
      %p66 = scmp.ne.s32.totalorder %s57, %s58
      %p67 = scmp.eq.s32.totalorder %s19, 0
      %p68 = por %p66, %p67
      %p69 = scmp.ne.s32.totalorder %s57, %s58
      %p70 = scmp.eq.s32.totalorder %s20, 1
      %p71 = por %p69, %p70
      %p73 = scmp.ne.s32.totalorder %s58, %s72
      %p74 = scmp.eq.s32.totalorder %s20, 0
      %p75 = por %p73, %p74
      %s76 = sadd.s32 %s21, %s22
      %s77 = sadd.s32 %s33, %s29
      %s78 = ssub.s32 %s76, %s77
      %p79 = scmp.eq.s32.totalorder %s78, 0
      %s81 = sadd.s32 %s80, 1
      %s82 = scalar_select %p79, %s80, %s81
      %p85 = pneg %p79
      %p86 = scmp.eq.s32.totalorder %s14, 1
      %p87 = por %p85, %p86
      %p88 = scmp.ne.s32.totalorder %s80, %s83
      %p89 = scmp.eq.s32.totalorder %s14, 0
      %p90 = por %p88, %p89
      %p91 = scmp.ne.s32.totalorder %s80, %s83
      %p92 = scmp.eq.s32.totalorder %s19, 1
      %p93 = por %p91, %p92
      %p94 = scmp.ne.s32.totalorder %s83, %s84
      %p95 = scmp.eq.s32.totalorder %s19, 0
      %p96 = por %p94, %p95
      %p97 = scmp.ne.s32.totalorder %s83, %s84
      %p98 = scmp.eq.s32.totalorder %s20, 1
      %p99 = por %p97, %p98
      %p101 = scmp.ne.s32.totalorder %s84, %s100
      %p102 = scmp.eq.s32.totalorder %s20, 0
      %p103 = por %p101, %p102
      %s104 = ssub.s32 %s21, %s33
      %p105 = scmp.eq.s32.totalorder %s104, 0
      %s107 = sadd.s32 %s106, 1
      %s108 = scalar_select %p105, %s106, %s107
      %p111 = pneg %p105
      %p112 = scmp.eq.s32.totalorder %s14, 1
      %p113 = por %p111, %p112
      %p114 = scmp.ne.s32.totalorder %s106, %s109
      %p115 = scmp.eq.s32.totalorder %s14, 0
      %p116 = por %p114, %p115
      %p117 = scmp.ne.s32.totalorder %s106, %s109
      %p118 = scmp.eq.s32.totalorder %s19, 1
      %p119 = por %p117, %p118
      %p120 = scmp.ne.s32.totalorder %s109, %s110
      %p121 = scmp.eq.s32.totalorder %s19, 0
      %p122 = por %p120, %p121
      %p123 = scmp.ne.s32.totalorder %s109, %s110
      %p124 = scmp.eq.s32.totalorder %s20, 1
      %p125 = por %p123, %p124
      %p127 = scmp.ne.s32.totalorder %s110, %s126
      %p128 = scmp.eq.s32.totalorder %s20, 0
      %p129 = por %p127, %p128
      %p130 = scmp.le.s32.totalorder 1, %s14
      %p131 = scmp.lt.s32.totalorder %s14, 3
      %p132 = pnand %p130, %p131
      %p133 = pneg %p132
      // Predicated region
      $region9: #{tpu_custom_call.1} parent=5 // pred_check
        _
      $region10: #{tpu_custom_call.1} parent=5 // pred_check_branch
        %135 = sbr.rel (%p132) target = $region12
      $region11: #{tpu_custom_call.1} parent=5 // pred_region
        %s136 = ssub.s32 %s14, 1
        // Predicated region
        $region13: #{tpu_custom_call.1} parent=11 // pred_check
          %p137 = pneg %p47
        $region14: #{tpu_custom_call.1} parent=11 // pred_check_branch
          %139 = sbr.rel (%p137) target = $region16
        $region15: #{tpu_custom_call.1} parent=11 // pred_region
          %141 = vsyncadd [#allocation5], 0
          %s142 = sshll.u32 %s0, 4
          %s143 = int_to_ptr.hbm [resolvable:$true] %s142
          %s144 = sshll.u32 [#allocation4], 4
          %s145 = int_to_ptr.vmem [resolvable:$true] %s144
          %150 = dma.hbm_to_vmem [thread:$0]  %s143, 1536, %s145, [#allocation5], 256, 256, 16
        $region16: #{tpu_custom_call.1} parent=11 // pred_fallthru
          _
        // Predicated region
        $region17: #{tpu_custom_call.1} parent=11 // pred_check
          %p151 = pneg %p68
        $region18: #{tpu_custom_call.1} parent=11 // pred_check_branch
          %153 = sbr.rel (%p151) target = $region20
        $region19: #{tpu_custom_call.1} parent=11 // pred_region
          %155 = vsyncadd [#allocation8], 0
          %s156 = sshll.u32 %s1, 4
          %s157 = int_to_ptr.hbm [resolvable:$true] %s156
          %s158 = sshll.u32 [#allocation7], 4
          %s159 = int_to_ptr.vmem [resolvable:$true] %s158
          %164 = dma.hbm_to_vmem [thread:$0]  %s157, 256, %s159, [#allocation8], 128, 128, 8
        $region20: #{tpu_custom_call.1} parent=11 // pred_fallthru
          _
      $region12: #{tpu_custom_call.1} parent=5 // pred_fallthru
        _
      %p165 = scmp.lt.s32.totalorder %s14, 2
      // Predicated region
      $region21: #{tpu_custom_call.1} parent=5 // pred_check
        %p166 = pneg %p165
      $region22: #{tpu_custom_call.1} parent=5 // pred_check_branch
        %168 = sbr.rel (%p166) target = $region24
      $region23: #{tpu_custom_call.1} parent=5 // pred_region
        // Predicated region
        $region25: #{tpu_custom_call.1} parent=23 // pred_check
          %p169 = pneg %p90
        $region26: #{tpu_custom_call.1} parent=23 // pred_check_branch
          %171 = sbr.rel (%p169) target = $region28
        $region27: #{tpu_custom_call.1} parent=23 // pred_region
          %s172 = sand.u32 %s14, 1
          %s173 = scalar_lea.sflag [#allocation5], %s172
          %s174 = sand.u32 %s80, 1
          %s175 = smul.addr %s174, 128
          %s176 = scalar_lea.vmem [#allocation9], %s175
          %s177 = sadd.s32 %s21, %s22
          %179 = vsyncadd %s173, 0
          %s180 = smul.addr %s177, 4
          %s181 = scalar_lea.hbm %s2, %s180
          %s182 = sshll.u32 %s181, 4
          %s183 = int_to_ptr.hbm [resolvable:$true] %s182
          %s184 = sshll.u32 %s176, 4
          %s185 = int_to_ptr.vmem [resolvable:$true] %s184
          %190 = dma.hbm_to_vmem [thread:$0]  %s183, 2048, %s185, %s173, 128, 64, 4
        $region28: #{tpu_custom_call.1} parent=23 // pred_fallthru
          _
      $region24: #{tpu_custom_call.1} parent=5 // pred_fallthru
        _
      %p191 = scmp.le.s32.totalorder 1, %s14
      %p192 = scmp.lt.s32.totalorder %s14, 3
      %p193 = pnand %p191, %p192
      %p194 = pneg %p193
      // Predicated region
      $region29: #{tpu_custom_call.1} parent=5 // pred_check
        _
      $region30: #{tpu_custom_call.1} parent=5 // pred_check_branch
        %196 = sbr.rel (%p193) target = $region32
      $region31: #{tpu_custom_call.1} parent=5 // pred_region
        %s197 = ssub.s32 %s14, 1
        // Predicated region
        $region33: #{tpu_custom_call.1} parent=31 // pred_check
          %p198 = pneg %p47
        $region34: #{tpu_custom_call.1} parent=31 // pred_check_branch
          %200 = sbr.rel (%p198) target = $region36
        $region35: #{tpu_custom_call.1} parent=31 // pred_region
          %202 = dma.done [#allocation5], 1536
        $region36: #{tpu_custom_call.1} parent=31 // pred_fallthru
          _
        // Predicated region
        $region37: #{tpu_custom_call.1} parent=31 // pred_check
          %p203 = pneg %p68
        $region38: #{tpu_custom_call.1} parent=31 // pred_check_branch
          %205 = sbr.rel (%p203) target = $region40
        $region39: #{tpu_custom_call.1} parent=31 // pred_region
          %207 = dma.done [#allocation8], 256
        $region40: #{tpu_custom_call.1} parent=31 // pred_fallthru
          _
        %s208 = sand.u32 %s19, 1
        %s209 = scalar_lea.sflag [#allocation5], %s208
        %s210 = sand.u32 %s83, 1
        %s211 = smul.addr %s210, 128
        %s212 = scalar_lea.vmem [#allocation9], %s211
        // Predicated region
        $region41: #{tpu_custom_call.1} parent=31 // pred_check
          %p213 = pneg %p96
        $region42: #{tpu_custom_call.1} parent=31 // pred_check_branch
          %215 = sbr.rel (%p213) target = $region44
        $region43: #{tpu_custom_call.1} parent=31 // pred_region
          %217 = dma.done %s209, 2048
        $region44: #{tpu_custom_call.1} parent=31 // pred_fallthru
          _
        %p218 = pneg %p47
        %p219 = pneg %p44
        %p220 = pneg %p68
        %p221 = pneg %p65
        %s222 = sand.u32 %s19, 1
        %s223 = scalar_lea.sflag [#allocation5], %s222
        %s224 = sand.u32 %s83, 1
        %s225 = smul.addr %s224, 128
        %s226 = scalar_lea.vmem [#allocation9], %s225
        %p227 = pneg %p96
        %p228 = pneg %p93
        %p229 = pneg %p122
        %p230 = pneg %p119
        %s231 = sand.u32 %s109, 1
        %s232 = scalar_lea.sflag [#allocation6], %s231
        %s233 = sand.u32 %s109, 1
        %s234 = smul.addr %s233, 16
        %s235 = scalar_lea.vmem [#allocation10], %s234
        %s236 = sadd.s32 %s23, %s24
        %s237 = smul.u32 2, %s23
        %p238 = scmp.eq.s32.totalorder %s24, 0
        // Predicated region
        $region45: #{tpu_custom_call.1} parent=31 // pred_check
          %p239 = pneg %p238
        $region46: #{tpu_custom_call.1} parent=31 // pred_check_branch
          %241 = sbr.rel (%p239) target = $region48
        $region47: #{tpu_custom_call.1} parent=31 // pred_region
          %242 = vst [vmem:[#allocation3] sm:$0xff] 0.0
          %243 = vst [vmem:[#allocation3 + $0x8] sm:$0xff] 0.0
          %244 = vst [vmem:[#allocation3 + $0x10] sm:$0xff] 0.0
          %245 = vst [vmem:[#allocation3 + $0x18] sm:$0xff] 0.0
          %246 = vst [vmem:[#allocation3 + $0x20] sm:$0xff] 0.0
          %247 = vst [vmem:[#allocation3 + $0x28] sm:$0xff] 0.0
          %v248 = vld [vmem:[#allocation4] sm:$0xff]
          %v249 = vld [vmem:[#allocation4 + $0x8] sm:$0xff]
          %v250 = vld [vmem:[#allocation4 + $0x10] sm:$0xff]
          %v251 = vld [vmem:[#allocation4 + $0x18] sm:$0xff]
          %v252 = vld [vmem:[#allocation4 + $0x20] sm:$0xff]
          %v253 = vld [vmem:[#allocation4 + $0x28] sm:$0xff]
          %v254 = vld [vmem:[#allocation4 + $0x30] sm:$0xff]
          %v255 = vld [vmem:[#allocation4 + $0x38] sm:$0xff]
          %v256 = vld [vmem:[#allocation4 + $0x40] sm:$0xff]
          %v257 = vld [vmem:[#allocation4 + $0x48] sm:$0xff]
          %v258 = vld [vmem:[#allocation4 + $0x50] sm:$0xff]
          %v259 = vld [vmem:[#allocation4 + $0x58] sm:$0xff]
          %v260 = vpack.c.bf16 %v249, %v248
          %v261 = vpack.c.bf16 %v251, %v250
          %v262 = vpack.c.bf16 %v253, %v252
          %v263 = vpack.c.bf16 %v255, %v254
          %v264 = vpack.c.bf16 %v257, %v256
          %v265 = vpack.c.bf16 %v259, %v258
          %266 = vst [vmem:[#allocation2] sm:$0xff] %v260
          %267 = vst [vmem:[#allocation2 + $0x8] sm:$0xff] %v261
          %268 = vst [vmem:[#allocation2 + $0x10] sm:$0xff] %v262
          %269 = vst [vmem:[#allocation2 + $0x18] sm:$0xff] %v263
          %270 = vst [vmem:[#allocation2 + $0x20] sm:$0xff] %v264
          %271 = vst [vmem:[#allocation2 + $0x28] sm:$0xff] %v265
        $region48: #{tpu_custom_call.1} parent=31 // pred_fallthru
          _
        %v272 = vld [vmem:[#allocation2] sm:$0xff]
        %v273 = vld [vmem:[#allocation2 + $0x8] sm:$0xff]
        %v274 = vld [vmem:[#allocation2 + $0x10] sm:$0xff]
        %v275 = vld [vmem:[#allocation2 + $0x18] sm:$0xff]
        %v276 = vld [vmem:[#allocation2 + $0x20] sm:$0xff]
        %v277 = vld [vmem:[#allocation2 + $0x28] sm:$0xff]
        %v278 = vld [vmem:[%s212] sm:$0xf]
        %v279 = vld [vmem:[%s212 + $0x4] sm:$0xf]
        %v280 = vld [vmem:[%s212 + $0x8] sm:$0xf]
        %v281 = vld [vmem:[%s212 + $0xc] sm:$0xf]
        %v282 = vld [vmem:[%s212 + $0x10] sm:$0xf]
        %v283 = vld [vmem:[%s212 + $0x14] sm:$0xf]
        %v284 = vld [vmem:[%s212 + $0x18] sm:$0xf]
        %v285 = vld [vmem:[%s212 + $0x1c] sm:$0xf]
        %v286 = vld [vmem:[%s212 + $0x20] sm:$0xf]
        %v287 = vld [vmem:[%s212 + $0x24] sm:$0xf]
        %v288 = vld [vmem:[%s212 + $0x28] sm:$0xf]
        %v289 = vld [vmem:[%s212 + $0x2c] sm:$0xf]
        %v290 = vld [vmem:[%s212 + $0x30] sm:$0xf]
        %v291 = vld [vmem:[%s212 + $0x34] sm:$0xf]
        %v292 = vld [vmem:[%s212 + $0x38] sm:$0xf]
        %v293 = vld [vmem:[%s212 + $0x3c] sm:$0xf]
        %v294 = vld [vmem:[%s212 + $0x40] sm:$0xf]
        %v295 = vld [vmem:[%s212 + $0x44] sm:$0xf]
        %v296 = vld [vmem:[%s212 + $0x48] sm:$0xf]
        %v297 = vld [vmem:[%s212 + $0x4c] sm:$0xf]
        %v298 = vld [vmem:[%s212 + $0x50] sm:$0xf]
        %v299 = vld [vmem:[%s212 + $0x54] sm:$0xf]
        %v300 = vld [vmem:[%s212 + $0x58] sm:$0xf]
        %v301 = vld [vmem:[%s212 + $0x5c] sm:$0xf]
        %v302 = vld [vmem:[%s212 + $0x60] sm:$0xf]
        %v303 = vld [vmem:[%s212 + $0x64] sm:$0xf]
        %v304 = vld [vmem:[%s212 + $0x68] sm:$0xf]
        %v305 = vld [vmem:[%s212 + $0x6c] sm:$0xf]
        %v306 = vld [vmem:[%s212 + $0x70] sm:$0xf]
        %v307 = vld [vmem:[%s212 + $0x74] sm:$0xf]
        %v308 = vld [vmem:[%s212 + $0x78] sm:$0xf]
        %v309 = vld [vmem:[%s212 + $0x7c] sm:$0xf]
        %v316 = vunpack.c.l.b16 %v272
        %v317 = vunpack.c.h.b16 %v272
        %v318 = vunpack.c.l.b16 %v273
        %v319 = vunpack.c.h.b16 %v273
        %v320 = vunpack.c.l.b16 %v274
        %v321 = vunpack.c.h.b16 %v274
        %v322 = vunpack.c.l.b16 %v275
        %v323 = vunpack.c.h.b16 %v275
        %v324 = vunpack.c.l.b16 %v276
        %v325 = vunpack.c.h.b16 %v276
        %v326 = vunpack.c.l.b16 %v277
        %v327 = vunpack.c.h.b16 %v277
        %v328 = vpack.c.b16 %v318, %v316
        %v329 = vpack.c.b16 %v319, %v317
        %v330 = vpack.c.b16 %v322, %v320
        %v331 = vpack.c.b16 %v323, %v321
        %v332 = vpack.c.b16 %v326, %v324
        %v333 = vpack.c.b16 %v327, %v325
        %v372 = vunpack.c.l.b16 %v278
        %v373 = vunpack.c.l.b16 %v279
        %v374 = vunpack.c.l.b16 %v280
        %v375 = vunpack.c.l.b16 %v281
        %v376 = vunpack.c.l.b16 %v282
        %v377 = vunpack.c.l.b16 %v283
        %v378 = vunpack.c.l.b16 %v284
        %v379 = vunpack.c.l.b16 %v285
        %v380 = vunpack.c.l.b16 %v286
        %v381 = vunpack.c.l.b16 %v287
        %v382 = vunpack.c.l.b16 %v288
        %v383 = vunpack.c.l.b16 %v289
        %v384 = vunpack.c.l.b16 %v290
        %v385 = vunpack.c.l.b16 %v291
        %v386 = vunpack.c.l.b16 %v292
        %v387 = vunpack.c.l.b16 %v293
        %v388 = vunpack.c.l.b16 %v294
        %v389 = vunpack.c.l.b16 %v295
        %v390 = vunpack.c.l.b16 %v296
        %v391 = vunpack.c.l.b16 %v297
        %v392 = vunpack.c.l.b16 %v298
        %v393 = vunpack.c.l.b16 %v299
        %v394 = vunpack.c.l.b16 %v300
        %v395 = vunpack.c.l.b16 %v301
        %v396 = vunpack.c.l.b16 %v302
        %v397 = vunpack.c.l.b16 %v303
        %v398 = vunpack.c.l.b16 %v304
        %v399 = vunpack.c.l.b16 %v305
        %v400 = vunpack.c.l.b16 %v306
        %v401 = vunpack.c.l.b16 %v307
        %v402 = vunpack.c.l.b16 %v308
        %v403 = vunpack.c.l.b16 %v309
        %v404 = vpack.c.b16 %v373, %v372
        %v405 = vpack.c.b16 %v375, %v374
        %v406 = vpack.c.b16 %v377, %v376
        %v407 = vpack.c.b16 %v379, %v378
        %v408 = vpack.c.b16 %v381, %v380
        %v409 = vpack.c.b16 %v383, %v382
        %v410 = vpack.c.b16 %v385, %v384
        %v411 = vpack.c.b16 %v387, %v386
        %v412 = vpack.c.b16 %v389, %v388
        %v413 = vpack.c.b16 %v391, %v390
        %v414 = vpack.c.b16 %v393, %v392
        %v415 = vpack.c.b16 %v395, %v394
        %v416 = vpack.c.b16 %v397, %v396
        %v417 = vpack.c.b16 %v399, %v398
        %v418 = vpack.c.b16 %v401, %v400
        %v419 = vpack.c.b16 %v403, %v402
        %436 = vmatpush.bf16.msra.mxu0 %v411
        %437 = vmatpush.bf16.msra.mxu0 %v410
        %438 = vmatpush.bf16.msra.mxu0 %v409
        %439 = vmatpush.bf16.msra.mxu0 %v408
        %440 = vmatpush.bf16.msra.mxu0 %v407
        %441 = vmatpush.bf16.msra.mxu0 %v406
        %442 = vmatpush.bf16.msra.mxu0 %v405
        %443 = vmatpush.bf16.msra.mxu0 %v404
        %444 = vmatmul.bf16.gmra.mxu0 %v328
        %v445 = vpop.f32.mrf.mxu0
        %v446 = vadd.f32 0.0, %v445
        %v447 = vpop.f32.mrf.mxu0
        %v448 = vadd.f32 0.0, %v447
        %449 = vmatmul.bf16.gmra.mxu0 %v330
        %v450 = vpop.f32.mrf.mxu0
        %v451 = vadd.f32 0.0, %v450
        %v452 = vpop.f32.mrf.mxu0
        %v453 = vadd.f32 0.0, %v452
        %454 = vmatmul.bf16.gmra.mxu0 %v332
        %v455 = vpop.f32.mrf.mxu0
        %v456 = vadd.f32 0.0, %v455
        %v457 = vpop.f32.mrf.mxu0
        %v458 = vadd.f32 0.0, %v457
        %459 = vdwg.mxu0
        %460 = vmatpush.bf16.msra.mxu0 %v419
        %461 = vmatpush.bf16.msra.mxu0 %v418
        %462 = vmatpush.bf16.msra.mxu0 %v417
        %463 = vmatpush.bf16.msra.mxu0 %v416
        %464 = vmatpush.bf16.msra.mxu0 %v415
        %465 = vmatpush.bf16.msra.mxu0 %v414
        %466 = vmatpush.bf16.msra.mxu0 %v413
        %467 = vmatpush.bf16.msra.mxu0 %v412
        %468 = vmatmul.bf16.gmra.mxu0 %v329
        %v469 = vpop.f32.mrf.mxu0
        %v470 = vadd.f32 %v446, %v469
        %v471 = vpop.f32.mrf.mxu0
        %v472 = vadd.f32 %v448, %v471
        %473 = vmatmul.bf16.gmra.mxu0 %v331
        %v474 = vpop.f32.mrf.mxu0
        %v475 = vadd.f32 %v451, %v474
        %v476 = vpop.f32.mrf.mxu0
        %v477 = vadd.f32 %v453, %v476
        %478 = vmatmul.bf16.gmra.mxu0 %v333
        %v479 = vpop.f32.mrf.mxu0
        %v480 = vadd.f32 %v456, %v479
        %v481 = vpop.f32.mrf.mxu0
        %v482 = vadd.f32 %v458, %v481
        %483 = vdwg.mxu0
        %s484 = sadd.s32 %s23, %s24
        %s485 = smul.u32 %s484, 128
        %s486 = sshra.s32 %s485, 7
        %s487 = sand.u32 %s485, 127
        %s488 = smul.addr %s486, 8
        %s489 = scalar_lea.vmem [#allocation4], %s488
        %v490 = vld [vmem:[%s489] sm:$0xff]
        %v491 = vld [vmem:[%s489 + $0x10] sm:$0xff]
        %v492 = vld [vmem:[%s489 + $0x20] sm:$0xff]
        %v493 = vld [vmem:[%s489 + $0x30] sm:$0xff]
        %v494 = vld [vmem:[%s489 + $0x40] sm:$0xff]
        %v495 = vld [vmem:[%s489 + $0x50] sm:$0xff]
        %v496 = vmul.f32 %v470, %v490
        %v497 = vmul.f32 %v472, %v491
        %v498 = vmul.f32 %v475, %v492
        %v499 = vmul.f32 %v477, %v493
        %v500 = vmul.f32 %v480, %v494
        %v501 = vmul.f32 %v482, %v495
        %v502 = vld [vmem:[#allocation3] sm:$0xff]
        %v503 = vld [vmem:[#allocation3 + $0x8] sm:$0xff]
        %v504 = vld [vmem:[#allocation3 + $0x10] sm:$0xff]
        %v505 = vld [vmem:[#allocation3 + $0x18] sm:$0xff]
        %v506 = vld [vmem:[#allocation3 + $0x20] sm:$0xff]
        %v507 = vld [vmem:[#allocation3 + $0x28] sm:$0xff]
        %v508 = vadd.f32 %v502, %v496
        %v509 = vadd.f32 %v503, %v497
        %v510 = vadd.f32 %v504, %v498
        %v511 = vadd.f32 %v505, %v499
        %v512 = vadd.f32 %v506, %v500
        %v513 = vadd.f32 %v507, %v501
        %514 = vst [vmem:[#allocation3] sm:$0xff] %v508
        %515 = vst [vmem:[#allocation3 + $0x8] sm:$0xff] %v509
        %516 = vst [vmem:[#allocation3 + $0x10] sm:$0xff] %v510
        %517 = vst [vmem:[#allocation3 + $0x18] sm:$0xff] %v511
        %518 = vst [vmem:[#allocation3 + $0x20] sm:$0xff] %v512
        %519 = vst [vmem:[#allocation3 + $0x28] sm:$0xff] %v513
        // Predicated region
        $region49: #{tpu_custom_call.1} parent=31 // pred_check
          %p520 = pneg %p238
        $region50: #{tpu_custom_call.1} parent=31 // pred_check_branch
          %522 = sbr.rel (%p520) target = $region52
        $region51: #{tpu_custom_call.1} parent=31 // pred_region
          %v523 = vld [vmem:[#allocation3] sm:$0xff]
          %v524 = vld [vmem:[#allocation3 + $0x8] sm:$0xff]
          %v525 = vld [vmem:[#allocation3 + $0x10] sm:$0xff]
          %v526 = vld [vmem:[#allocation3 + $0x18] sm:$0xff]
          %v527 = vld [vmem:[#allocation3 + $0x20] sm:$0xff]
          %v528 = vld [vmem:[#allocation3 + $0x28] sm:$0xff]
          %529 = vadd.xlane.f32.xlu0 %v523
          %v530 = vpop.xlane.xlu0 %529
          %531 = vadd.xlane.f32.xlu0 %v524
          %v532 = vpop.xlane.xlu0 %531
          %533 = vadd.xlane.f32.xlu0 %v525
          %v534 = vpop.xlane.xlu0 %533
          %535 = vadd.xlane.f32.xlu0 %v526
          %v536 = vpop.xlane.xlu0 %535
          %537 = vadd.xlane.f32.xlu0 %v527
          %v538 = vpop.xlane.xlu0 %537
          %539 = vadd.xlane.f32.xlu0 %v528
          %v540 = vpop.xlane.xlu0 %539
          %v541 = vld [vmem:[#allocation7] sm:$0xff]
          %v542 = vld [vmem:[#allocation7 + $0x8] sm:$0xff]
          %vm543 = vcmask 392192
          %v545 = vsel %vm543, %v541, 0
          %v548 = vsel %vm543, %v542, 0
          %550 = vmatpush.msra.mxu0 0.0
          %551 = vmatpush.msra.mxu0 0.0
          %552 = vmatpush.msra.mxu0 0.0
          %553 = vmatpush.msra.mxu0 0.0
          %554 = vmatpush.msra.mxu0 0.0
          %555 = vmatpush.msra.mxu0 0.0
          %556 = vmatpush.msra.mxu0 0.0
          %557 = vmatpush.msra.mxu0 0.0
          %558 = vmatpush.msra.mxu0 0.0
          %559 = vmatpush.msra.mxu0 0.0
          %v560 = vand.u32 %v540, 4294901760
          %561 = vmatpush.msra.mxu0 %v560
          %v562 = vand.u32 %v538, 4294901760
          %563 = vmatpush.msra.mxu0 %v562
          %v564 = vand.u32 %v536, 4294901760
          %565 = vmatpush.msra.mxu0 %v564
          %v566 = vand.u32 %v534, 4294901760
          %567 = vmatpush.msra.mxu0 %v566
          %v568 = vand.u32 %v532, 4294901760
          %569 = vmatpush.msra.mxu0 %v568
          %v570 = vand.u32 %v530, 4294901760
          %571 = vmatpush.msra.mxu0 %v570
          %v572 = vand.u32 %v545, 4294901760
          %v573 = vsub.f32 %v545, %v572
          %v574 = vand.u32 %v573, 4294901760
          %v575 = vsub.f32 %v573, %v574
          %v576 = vand.u32 %v575, 4294901760
          %577 = vmatmul.f32.gmra.mxu0 %v576
          %v578 = vpop.f32.mrf.mxu0
          %v579 = vadd.f32 0.0, %v578
          %v580 = vand.u32 %v548, 4294901760
          %v581 = vsub.f32 %v548, %v580
          %v582 = vand.u32 %v581, 4294901760
          %v583 = vsub.f32 %v581, %v582
          %v584 = vand.u32 %v583, 4294901760
          %585 = vmatmul.f32.gmra.mxu0 %v584
          %v586 = vpop.f32.mrf.mxu0
          %v587 = vadd.f32 0.0, %v586
          %588 = vdwg.mxu0
          %589 = vmatpush.msra.mxu0 0.0
          %590 = vmatpush.msra.mxu0 0.0
          %591 = vmatpush.msra.mxu0 0.0
          %592 = vmatpush.msra.mxu0 0.0
          %593 = vmatpush.msra.mxu0 0.0
          %594 = vmatpush.msra.mxu0 0.0
          %595 = vmatpush.msra.mxu0 0.0
          %596 = vmatpush.msra.mxu0 0.0
          %597 = vmatpush.msra.mxu0 0.0
          %598 = vmatpush.msra.mxu0 0.0
          %v599 = vand.u32 %v540, 4294901760
          %v600 = vsub.f32 %v540, %v599
          %v601 = vand.u32 %v600, 4294901760
          %v602 = vsub.f32 %v600, %v601
          %v603 = vand.u32 %v602, 4294901760
          %604 = vmatpush.msra.mxu0 %v603
          %v605 = vand.u32 %v538, 4294901760
          %v606 = vsub.f32 %v538, %v605
          %v607 = vand.u32 %v606, 4294901760
          %v608 = vsub.f32 %v606, %v607
          %v609 = vand.u32 %v608, 4294901760
          %610 = vmatpush.msra.mxu0 %v609
          %v611 = vand.u32 %v536, 4294901760
          %v612 = vsub.f32 %v536, %v611
          %v613 = vand.u32 %v612, 4294901760
          %v614 = vsub.f32 %v612, %v613
          %v615 = vand.u32 %v614, 4294901760
          %616 = vmatpush.msra.mxu0 %v615
          %v617 = vand.u32 %v534, 4294901760
          %v618 = vsub.f32 %v534, %v617
          %v619 = vand.u32 %v618, 4294901760
          %v620 = vsub.f32 %v618, %v619
          %v621 = vand.u32 %v620, 4294901760
          %622 = vmatpush.msra.mxu0 %v621
          %v623 = vand.u32 %v532, 4294901760
          %v624 = vsub.f32 %v532, %v623
          %v625 = vand.u32 %v624, 4294901760
          %v626 = vsub.f32 %v624, %v625
          %v627 = vand.u32 %v626, 4294901760
          %628 = vmatpush.msra.mxu0 %v627
          %v629 = vand.u32 %v530, 4294901760
          %v630 = vsub.f32 %v530, %v629
          %v631 = vand.u32 %v630, 4294901760
          %v632 = vsub.f32 %v630, %v631
          %v633 = vand.u32 %v632, 4294901760
          %634 = vmatpush.msra.mxu0 %v633
          %v635 = vand.u32 %v545, 4294901760
          %636 = vmatmul.f32.gmra.mxu0 %v635
          %v637 = vpop.f32.mrf.mxu0
          %v638 = vadd.f32 %v579, %v637
          %v639 = vand.u32 %v548, 4294901760
          %640 = vmatmul.f32.gmra.mxu0 %v639
          %v641 = vpop.f32.mrf.mxu0
          %v642 = vadd.f32 %v587, %v641
          %643 = vdwg.mxu0
          %644 = vmatpush.msra.mxu0 0.0
          %645 = vmatpush.msra.mxu0 0.0
          %646 = vmatpush.msra.mxu0 0.0
          %647 = vmatpush.msra.mxu0 0.0
          %648 = vmatpush.msra.mxu0 0.0
          %649 = vmatpush.msra.mxu0 0.0
          %650 = vmatpush.msra.mxu0 0.0
          %651 = vmatpush.msra.mxu0 0.0
          %652 = vmatpush.msra.mxu0 0.0
          %653 = vmatpush.msra.mxu0 0.0
          %v654 = vand.u32 %v540, 4294901760
          %v655 = vsub.f32 %v540, %v654
          %656 = vmatpush.msra.mxu0 %v655
          %v657 = vand.u32 %v538, 4294901760
          %v658 = vsub.f32 %v538, %v657
          %659 = vmatpush.msra.mxu0 %v658
          %v660 = vand.u32 %v536, 4294901760
          %v661 = vsub.f32 %v536, %v660
          %662 = vmatpush.msra.mxu0 %v661
          %v663 = vand.u32 %v534, 4294901760
          %v664 = vsub.f32 %v534, %v663
          %665 = vmatpush.msra.mxu0 %v664
          %v666 = vand.u32 %v532, 4294901760
          %v667 = vsub.f32 %v532, %v666
          %668 = vmatpush.msra.mxu0 %v667
          %v669 = vand.u32 %v530, 4294901760
          %v670 = vsub.f32 %v530, %v669
          %671 = vmatpush.msra.mxu0 %v670
          %v672 = vand.u32 %v545, 4294901760
          %v673 = vsub.f32 %v545, %v672
          %674 = vmatmul.f32.gmra.mxu0 %v673
          %v675 = vpop.f32.mrf.mxu0
          %v676 = vadd.f32 %v638, %v675
          %v677 = vand.u32 %v548, 4294901760
          %v678 = vsub.f32 %v548, %v677
          %679 = vmatmul.f32.gmra.mxu0 %v678
          %v680 = vpop.f32.mrf.mxu0
          %v681 = vadd.f32 %v642, %v680
          %682 = vdwg.mxu0
          %683 = vmatpush.msra.mxu0 0.0
          %684 = vmatpush.msra.mxu0 0.0
          %685 = vmatpush.msra.mxu0 0.0
          %686 = vmatpush.msra.mxu0 0.0
          %687 = vmatpush.msra.mxu0 0.0
          %688 = vmatpush.msra.mxu0 0.0
          %689 = vmatpush.msra.mxu0 0.0
          %690 = vmatpush.msra.mxu0 0.0
          %691 = vmatpush.msra.mxu0 0.0
          %692 = vmatpush.msra.mxu0 0.0
          %v693 = vand.u32 %v540, 4294901760
          %694 = vmatpush.msra.mxu0 %v693
          %v695 = vand.u32 %v538, 4294901760
          %696 = vmatpush.msra.mxu0 %v695
          %v697 = vand.u32 %v536, 4294901760
          %698 = vmatpush.msra.mxu0 %v697
          %v699 = vand.u32 %v534, 4294901760
          %700 = vmatpush.msra.mxu0 %v699
          %v701 = vand.u32 %v532, 4294901760
          %702 = vmatpush.msra.mxu0 %v701
          %v703 = vand.u32 %v530, 4294901760
          %704 = vmatpush.msra.mxu0 %v703
          %v705 = vand.u32 %v545, 4294901760
          %v706 = vsub.f32 %v545, %v705
          %v707 = vand.u32 %v706, 4294901760
          %708 = vmatmul.f32.gmra.mxu0 %v707
          %v709 = vpop.f32.mrf.mxu0
          %v710 = vadd.f32 %v676, %v709
          %v711 = vand.u32 %v548, 4294901760
          %v712 = vsub.f32 %v548, %v711
          %v713 = vand.u32 %v712, 4294901760
          %714 = vmatmul.f32.gmra.mxu0 %v713
          %v715 = vpop.f32.mrf.mxu0
          %v716 = vadd.f32 %v681, %v715
          %717 = vdwg.mxu0
          %718 = vmatpush.msra.mxu0 0.0
          %719 = vmatpush.msra.mxu0 0.0
          %720 = vmatpush.msra.mxu0 0.0
          %721 = vmatpush.msra.mxu0 0.0
          %722 = vmatpush.msra.mxu0 0.0
          %723 = vmatpush.msra.mxu0 0.0
          %724 = vmatpush.msra.mxu0 0.0
          %725 = vmatpush.msra.mxu0 0.0
          %726 = vmatpush.msra.mxu0 0.0
          %727 = vmatpush.msra.mxu0 0.0
          %v728 = vand.u32 %v540, 4294901760
          %v729 = vsub.f32 %v540, %v728
          %v730 = vand.u32 %v729, 4294901760
          %731 = vmatpush.msra.mxu0 %v730
          %v732 = vand.u32 %v538, 4294901760
          %v733 = vsub.f32 %v538, %v732
          %v734 = vand.u32 %v733, 4294901760
          %735 = vmatpush.msra.mxu0 %v734
          %v736 = vand.u32 %v536, 4294901760
          %v737 = vsub.f32 %v536, %v736
          %v738 = vand.u32 %v737, 4294901760
          %739 = vmatpush.msra.mxu0 %v738
          %v740 = vand.u32 %v534, 4294901760
          %v741 = vsub.f32 %v534, %v740
          %v742 = vand.u32 %v741, 4294901760
          %743 = vmatpush.msra.mxu0 %v742
          %v744 = vand.u32 %v532, 4294901760
          %v745 = vsub.f32 %v532, %v744
          %v746 = vand.u32 %v745, 4294901760
          %747 = vmatpush.msra.mxu0 %v746
          %v748 = vand.u32 %v530, 4294901760
          %v749 = vsub.f32 %v530, %v748
          %v750 = vand.u32 %v749, 4294901760
          %751 = vmatpush.msra.mxu0 %v750
          %v752 = vand.u32 %v545, 4294901760
          %753 = vmatmul.f32.gmra.mxu0 %v752
          %v754 = vpop.f32.mrf.mxu0
          %v755 = vadd.f32 %v710, %v754
          %v756 = vand.u32 %v548, 4294901760
          %757 = vmatmul.f32.gmra.mxu0 %v756
          %v758 = vpop.f32.mrf.mxu0
          %v759 = vadd.f32 %v716, %v758
          %760 = vdwg.mxu0
          %761 = vmatpush.msra.mxu0 0.0
          %762 = vmatpush.msra.mxu0 0.0
          %763 = vmatpush.msra.mxu0 0.0
          %764 = vmatpush.msra.mxu0 0.0
          %765 = vmatpush.msra.mxu0 0.0
          %766 = vmatpush.msra.mxu0 0.0
          %767 = vmatpush.msra.mxu0 0.0
          %768 = vmatpush.msra.mxu0 0.0
          %769 = vmatpush.msra.mxu0 0.0
          %770 = vmatpush.msra.mxu0 0.0
          %v771 = vand.u32 %v540, 4294901760
          %772 = vmatpush.msra.mxu0 %v771
          %v773 = vand.u32 %v538, 4294901760
          %774 = vmatpush.msra.mxu0 %v773
          %v775 = vand.u32 %v536, 4294901760
          %776 = vmatpush.msra.mxu0 %v775
          %v777 = vand.u32 %v534, 4294901760
          %778 = vmatpush.msra.mxu0 %v777
          %v779 = vand.u32 %v532, 4294901760
          %780 = vmatpush.msra.mxu0 %v779
          %v781 = vand.u32 %v530, 4294901760
          %782 = vmatpush.msra.mxu0 %v781
          %v783 = vand.u32 %v545, 4294901760
          %784 = vmatmul.f32.gmra.mxu0 %v783
          %v785 = vpop.f32.mrf.mxu0
          %v786 = vadd.f32 %v755, %v785
          %v787 = vand.u32 %v548, 4294901760
          %788 = vmatmul.f32.gmra.mxu0 %v787
          %v789 = vpop.f32.mrf.mxu0
          %v790 = vadd.f32 %v759, %v789
          %791 = vdwg.mxu0
          %792 = vst [vmem:[%s235] sm:$0xff] %v786
          %793 = vst [vmem:[%s235 + $0x8] sm:$0xff] %v790
        $region52: #{tpu_custom_call.1} parent=31 // pred_fallthru
          _
        %s794 = sand.u32 %s109, 1
        %s795 = scalar_lea.sflag [#allocation6], %s794
        %s796 = sand.u32 %s109, 1
        %s797 = smul.addr %s796, 16
        %s798 = scalar_lea.vmem [#allocation10], %s797
        // Predicated region
        $region53: #{tpu_custom_call.1} parent=31 // pred_check
          %p799 = pneg %p119
        $region54: #{tpu_custom_call.1} parent=31 // pred_check_branch
          %801 = sbr.rel (%p799) target = $region56
        $region55: #{tpu_custom_call.1} parent=31 // pred_region
          %s802 = smul.u32 2, %s23
          %804 = vsyncadd %s795, 0
          %s805 = smul.addr %s802, 8
          %s806 = scalar_lea.hbm %s3, %s805
          %s807 = sshll.u32 %s798, 4
          %s808 = int_to_ptr.vmem [resolvable:$true] %s807
          %s809 = sshll.u32 %s806, 4
          %s810 = int_to_ptr.hbm [resolvable:$true] %s809
          %815 = dma.vmem_to_hbm [thread:$0]  %s808, 256, %s810, %s795, 128, 128, 8
        $region56: #{tpu_custom_call.1} parent=31 // pred_fallthru
          _
      $region32: #{tpu_custom_call.1} parent=5 // pred_fallthru
        _
      %p816 = scmp.le.s32.totalorder 2, %s14
      // Predicated region
      $region57: #{tpu_custom_call.1} parent=5 // pred_check
        %p817 = pneg %p816
      $region58: #{tpu_custom_call.1} parent=5 // pred_check_branch
        %819 = sbr.rel (%p817) target = $region60
      $region59: #{tpu_custom_call.1} parent=5 // pred_region
        %s820 = ssub.s32 %s14, 2
        // Predicated region
        $region61: #{tpu_custom_call.1} parent=59 // pred_check
          %p821 = pneg %p125
        $region62: #{tpu_custom_call.1} parent=59 // pred_check_branch
          %823 = sbr.rel (%p821) target = $region64
        $region63: #{tpu_custom_call.1} parent=59 // pred_region
          %s824 = sand.u32 %s110, 1
          %s825 = scalar_lea.sflag [#allocation6], %s824
          %s826 = sand.u32 %s110, 1
          %s827 = smul.addr %s826, 16
          %s828 = scalar_lea.vmem [#allocation10], %s827
          %830 = dma.done %s825, 256
        $region64: #{tpu_custom_call.1} parent=59 // pred_fallthru
          _
      $region60: #{tpu_custom_call.1} parent=5 // pred_fallthru
        _
    $region6: #{tpu_custom_call.1} parent=1 // loop_footer
      %s18 = sadd.s32 1, %s14
    $region7: #{tpu_custom_call.1} parent=1 // loop_footer_branch
      %13 = sbr.rel target = $region3
    $region8: #{tpu_custom_call.1} parent=1 // loop_exit
      _
    %831 = vsyncpa [#allocation5], 1
    %s832 = scalar_lea.sflag [#allocation5], 1
    %833 = vsyncpa %s832, 1
    %834 = vsyncpa [#allocation8], 1
    %835 = vsyncpa [#allocation6], 1
    %s836 = scalar_lea.sflag [#allocation6], 1
    %837 = vsyncpa %s836, 1

</llo_original>
